<compile_context>
chip_gen: v6e
topology: v6e:2x2x1
jax: 0.10.0
libtpu: 0.0.40
codegen_flags: <defaults>
</compile_context>

<pallas_src>
import math
import functools

import jax
import jax.numpy as jnp
from jax import lax
from jax.experimental import pallas as pl
from jax.experimental.pallas import tpu as pltpu

_EPS = 1e-8  # matches F.cosine_similarity default


def _round_up(x, m):
    return ((x + m - 1) // m) * m


def _cdiv(a, b):
    return -(-a // b)


def _tpu_generation_defaults():
    """(num partial-sum slots, per-input tile budget in bytes) by generation."""
    try:
        kind = jax.devices()[0].device_kind.lower()
    except Exception:
        kind = ""
    if "v7" in kind or "7x" in kind:
        # 2 TCs/chip, ~3.2 TB/s HBM: bigger tiles amortize ~0.35us/step
        # overhead; 2 inputs x 2 buffers x 4 MiB = 16 MiB << 32 MiB default.
        return 2, 4 << 20
    if "v6" in kind:
        return 1, 3 << 20
    # v5e / unknown: scoped VMEM default is only 16 MiB -> stay conservative.
    return 1, 2 << 20


def _cosine_loss_kernel(*refs, valid_rows, tile_rows, tiles_per_slot, fold):
    if fold > 1:
        x1_ref, x2_ref, s_ref, out_ref = refs
    else:
        x1_ref, x2_ref, out_ref = refs

    c = pl.program_id(0)   # partial-sum slot          ("parallel")
    i = pl.program_id(1)   # row tile within the slot  ("arbitrary")

    @pl.when(i == 0)
    def _init():
        out_ref[0, 0] = 0.0

    x1 = x1_ref[...].astype(jnp.float32)
    x2 = x2_ref[...].astype(jnp.float32)

    if fold > 1:
        # Lane-dense small-D path: each VMEM row packs `fold` logical rows of
        # width d (fold*d == 128).  Per-logical-row reductions are a tiny MXU
        # matmul against a 0/1 segment selector; products are consumed one at
        # a time so at most one tile-sized f32 temporary is live.
        s = s_ref[...]
        dot = jnp.dot(x1 * x2, s, preferred_element_type=jnp.float32,
                      precision=lax.Precision.HIGHEST)
        ss1 = jnp.dot(x1 * x1, s, preferred_element_type=jnp.float32,
                      precision=lax.Precision.HIGHEST)
        ss2 = jnp.dot(x2 * x2, s, preferred_element_type=jnp.float32,
                      precision=lax.Precision.HIGHEST)
    else:
        dot = jnp.sum(x1 * x2, axis=-1, keepdims=True)
        ss1 = jnp.sum(x1 * x1, axis=-1, keepdims=True)
        ss2 = jnp.sum(x2 * x2, axis=-1, keepdims=True)

    # cos = dot / max(||x1||*||x2||, eps) == dot * rsqrt(max(ss1*ss2, eps^2))
    cos = dot * lax.rsqrt(jnp.maximum(ss1 * ss2, _EPS * _EPS))

    t = c * tiles_per_slot + i                    # logical tile id
    needs_mask = (t + 1) * tile_rows > valid_rows  # partial / overhang tile?

    @pl.when(jnp.logical_not(needs_mask))
    def _steady():
        out_ref[0, 0] += jnp.sum(cos)

    @pl.when(needs_mask)
    def _tail():
        # jnp.where *selects*, so NaN/Inf from uninitialized padded rows never
        # reaches the accumulated sum.
        local = lax.broadcasted_iota(jnp.int32, cos.shape, 0)
        ok = (t * tile_rows + local) < valid_rows
        out_ref[0, 0] += jnp.sum(jnp.where(ok, cos, 0.0))


def cosine_similarity_loss(x1, x2, *, tile_bytes=None, num_slots=None):
    """1 - mean(cosine_similarity(x1, x2, dim=-1)) via a Pallas TPU kernel."""
    assert x1.shape == x2.shape, "x1 and x2 must have the same shape"
    d = x1.shape[-1]
    rows = int(math.prod(x1.shape[:-1])) if x1.ndim > 1 else 1
    if d == 0:
        return jnp.float32(1.0)          # cos_sim == 0 everywhere -> loss 1
    if rows == 0:
        return jnp.float32(jnp.nan)      # mean over empty -> NaN (torch parity)

    gen_slots, gen_tile_bytes = _tpu_generation_defaults()
    num_slots = gen_slots if num_slots is None else num_slots
    tile_bytes = gen_tile_bytes if tile_bytes is None else tile_bytes

    itemsize = jnp.dtype(x1.dtype).itemsize
    # Packed-dtype sublane multiple: 8 (32-bit), 16 (16-bit), 32 (8-bit).
    sub_mult = 8 * max(1, 4 // itemsize)

    # Lane-dense repack for small D: fold g = 128//d logical rows into the
    # 128-lane axis (free row-major reshape).
    fold = 1
    if d < 128 and 128 % d == 0 and rows % (128 // d) == 0:
        fold = 128 // d

    kernel_rows = rows // fold            # rows as seen by the kernel
    kernel_d = d * fold                    # lane width as seen by the kernel
    d_pad = _round_up(kernel_d, 128)       # VMEM lane padding

    x1_2d = x1.reshape(kernel_rows, kernel_d)
    x2_2d = x2.reshape(kernel_rows, kernel_d)

    # Row tile sized from the padded VMEM footprint; a single full-extent tile
    # is used whenever it fits (always legal: block dim == full array dim).
    cap = max(sub_mult, (tile_bytes // (d_pad * itemsize)) // sub_mult * sub_mult)
    tile_rows = kernel_rows if kernel_rows <= cap else cap

    total_tiles = _cdiv(kernel_rows, tile_rows)
    tiles_per_slot = _cdiv(total_tiles, num_slots)

    def in_map(c, i):
        # Overhang tiles of the second slot re-read the last real tile; their
        # rows are masked in-kernel so they contribute exactly zero.
        t = c * tiles_per_slot + i
        return (jnp.minimum(t, total_tiles - 1), 0)

    in_specs = [pl.BlockSpec((tile_rows, kernel_d), in_map),
                pl.BlockSpec((tile_rows, kernel_d), in_map)]
    args = [x1_2d, x2_2d]
    if fold > 1:
        # 0/1 segment selector: column j sums the j-th width-d lane segment.
        seg = (lax.broadcasted_iota(jnp.int32, (kernel_d, fold), 0) // d ==
               lax.broadcasted_iota(jnp.int32, (kernel_d, fold), 1)
               ).astype(jnp.float32)
        in_specs.append(pl.BlockSpec((kernel_d, fold), lambda c, i: (0, 0)))
        args.append(seg)

    kernel = functools.partial(
        _cosine_loss_kernel, valid_rows=kernel_rows, tile_rows=tile_rows,
        tiles_per_slot=tiles_per_slot, fold=fold)

    # Scoped-VMEM budget: 2 inputs x 2 pipeline buffers of the padded tile,
    # a few tile-sized f32 temporaries, plus slack.  Safe on every generation.
    tile_in_bytes = tile_rows * d_pad * itemsize
    tile_f32_bytes = tile_rows * d_pad * 4
    vmem_limit = 2 * 2 * tile_in_bytes + 3 * tile_f32_bytes + (2 << 20)
    vmem_limit = int(min(max(vmem_limit, 16 << 20), 40 << 20))

    partials = pl.pallas_call(
        kernel,
        out_shape=jax.ShapeDtypeStruct((num_slots, 1), jnp.float32),
        grid=(num_slots, tiles_per_slot),
        in_specs=in_specs,
        out_specs=pl.BlockSpec((1, 1), lambda c, i: (c, 0),
                               memory_space=pltpu.SMEM),
        compiler_params=pltpu.CompilerParams(
            dimension_semantics=("parallel", "arbitrary"),
            vmem_limit_bytes=vmem_limit),
        cost_estimate=pl.CostEstimate(
            flops=6 * rows * d,
            transcendentals=rows,
            bytes_accessed=2 * rows * d * itemsize + 4 * num_slots),
    )(*args)

    # Combine per-slot partial sums; mean over the true row count.
    return 1.0 - jnp.sum(partials) / rows


def _reference_loss(x1, x2):
    dot = jnp.sum(x1 * x2, axis=-1)
    denom = jnp.maximum(
        jnp.linalg.norm(x1, axis=-1) * jnp.linalg.norm(x2, axis=-1), _EPS)
    return 1.0 - jnp.mean(dot / denom)


if __name__ == "__main__":
    key = jax.random.PRNGKey(0)
    k1, k2, k3, k4, k5, k6 = jax.random.split(key, 6)

    results = []

    # 1) Module-consistent shape (batch=2, seq=8, hidden=32): folded path.
    a = jax.random.normal(k1, (2, 8, 32), dtype=jnp.float32)
    b = jax.random.normal(k2, (2, 8, 32), dtype=jnp.float32)
    results.append((cosine_similarity_loss(a, b), _reference_loss(a, b)))

    # 2) D that does not divide 128: un-folded fallback path.
    c = jax.random.normal(k3, (2, 8, 40), dtype=jnp.float32)
    d = jax.random.normal(k4, (2, 8, 40), dtype=jnp.float32)
    results.append((cosine_similarity_loss(c, d), _reference_loss(c, d)))

    # 3) Tiny forced tile budget: multi-tile accumulation + masked tail tile.
    e = jax.random.normal(k5, (2, 24, 32), dtype=jnp.float32)
    f = jax.random.normal(k6, (2, 24, 32), dtype=jnp.float32)
    results.append((cosine_similarity_loss(e, f, tile_bytes=8 * 128 * 4),
                    _reference_loss(e, f)))

    ok = True
    for got, ref in results:
        got = jax.block_until_ready(got)
        ok = ok and bool(jnp.allclose(got, ref, atol=1e-5, rtol=1e-5))
    assert ok, [(float(g), float(r)) for g, r in results]
    print("KERNEL_OK")
</pallas_src>

<mosaic_0001>
module attributes {stable_mosaic.version = 11 : i64} {
  func.func @_cosine_loss_kernel(%arg0: i32, %arg1: i32, %arg2: memref<4x128xf32, #tpu.memory_space<vmem>>, %arg3: memref<4x128xf32, #tpu.memory_space<vmem>>, %arg4: memref<128x4xf32, #tpu.memory_space<vmem>>, %arg5: memref<1x1xf32, #tpu.memory_space<smem>>) attributes {dimension_semantics = [#tpu.dimension_semantics<parallel>, #tpu.dimension_semantics<arbitrary>], iteration_bounds = array<i64: 1, 1>, scalar_prefetch = 0 : i64, scratch_operands = 0 : i64, tpu.core_type = #tpu.core_type<tc>, window_params = [{transform_indices = @transform_0, window_bounds = array<i64: 4, 128>}, {transform_indices = @transform_1, window_bounds = array<i64: 4, 128>}, {pipeline_mode = #tpu.pipeline_mode<synchronous>, transform_indices = @transform_2, window_bounds = array<i64: 128, 4>}, {transform_indices = @transform_3, window_bounds = array<i64: 1, 1>}]} {
    %c0_i32 = arith.constant 0 : i32
    %0 = arith.cmpi eq, %arg1, %c0_i32 : i32
    %1 = arith.extui %0 : i1 to i32
    %c0_i32_0 = arith.constant 0 : i32
    %2 = arith.cmpi ne, %1, %c0_i32_0 : i32
    scf.if %2 {
      %cst_13 = arith.constant 0.000000e+00 : f32
      %c0_14 = arith.constant 0 : index
      %c0_15 = arith.constant 0 : index
      %27 = memref.load %arg5[%c0_14, %c0_15] : memref<1x1xf32, #tpu.memory_space<smem>>
      memref.store %cst_13, %arg5[%c0_14, %c0_15] : memref<1x1xf32, #tpu.memory_space<smem>>
    } else {
    }
    %c0 = arith.constant 0 : index
    %c0_1 = arith.constant 0 : index
    %3 = vector.load %arg2[%c0, %c0_1] : memref<4x128xf32, #tpu.memory_space<vmem>>, vector<4x128xf32>
    %c0_2 = arith.constant 0 : index
    %c0_3 = arith.constant 0 : index
    %4 = vector.load %arg3[%c0_2, %c0_3] : memref<4x128xf32, #tpu.memory_space<vmem>>, vector<4x128xf32>
    %c0_4 = arith.constant 0 : index
    %c0_5 = arith.constant 0 : index
    %5 = vector.load %arg4[%c0_4, %c0_5] : memref<128x4xf32, #tpu.memory_space<vmem>>, vector<128x4xf32>
    %6 = arith.mulf %3, %4 : vector<4x128xf32>
    %cst = arith.constant dense<0.000000e+00> : vector<4x4xf32>
    %7 = tpu.matmul %6, %5, %cst {dimension_numbers = #tpu.dot_dimension_numbers<[1], [0], [0], [1], [0, 0, 1, 1], [], []>, precision = #tpu.contract_precision<fp32>} : vector<4x128xf32>, vector<128x4xf32>, vector<4x4xf32> -> vector<4x4xf32>
    %8 = arith.mulf %3, %3 : vector<4x128xf32>
    %cst_6 = arith.constant dense<0.000000e+00> : vector<4x4xf32>
    %9 = tpu.matmul %8, %5, %cst_6 {dimension_numbers = #tpu.dot_dimension_numbers<[1], [0], [0], [1], [0, 0, 1, 1], [], []>, precision = #tpu.contract_precision<fp32>} : vector<4x128xf32>, vector<128x4xf32>, vector<4x4xf32> -> vector<4x4xf32>
    %10 = arith.mulf %4, %4 : vector<4x128xf32>
    %cst_7 = arith.constant dense<0.000000e+00> : vector<4x4xf32>
    %11 = tpu.matmul %10, %5, %cst_7 {dimension_numbers = #tpu.dot_dimension_numbers<[1], [0], [0], [1], [0, 0, 1, 1], [], []>, precision = #tpu.contract_precision<fp32>} : vector<4x128xf32>, vector<128x4xf32>, vector<4x4xf32> -> vector<4x4xf32>
    %12 = arith.mulf %9, %11 : vector<4x4xf32>
    %cst_8 = arith.constant 1.000000e-16 : f32
    %13 = vector.broadcast %cst_8 : f32 to vector<4x4xf32>
    %14 = arith.maximumf %12, %13 : vector<4x4xf32>
    %15 = math.rsqrt %14 : vector<4x4xf32>
    %16 = arith.mulf %7, %15 : vector<4x4xf32>
    %c1_i32 = arith.constant 1 : i32
    %17 = arith.muli %arg0, %c1_i32 : i32
    %18 = arith.addi %17, %arg1 : i32
    %c1_i32_9 = arith.constant 1 : i32
    %19 = arith.addi %18, %c1_i32_9 : i32
    %c4_i32 = arith.constant 4 : i32
    %20 = arith.muli %19, %c4_i32 : i32
    %c4_i32_10 = arith.constant 4 : i32
    %21 = arith.cmpi sgt, %20, %c4_i32_10 : i32
    %true = arith.constant true
    %22 = arith.xori %21, %true : i1
    %23 = arith.extui %22 : i1 to i32
    %c0_i32_11 = arith.constant 0 : i32
    %24 = arith.cmpi ne, %23, %c0_i32_11 : i32
    scf.if %24 {
      %c0_13 = arith.constant 0 : index
      %c0_14 = arith.constant 0 : index
      %27 = memref.load %arg5[%c0_13, %c0_14] : memref<1x1xf32, #tpu.memory_space<smem>>
      %28 = vector.shape_cast %16 : vector<4x4xf32> to vector<1x4x4xf32>
      %cst_15 = arith.constant dense<0.000000e+00> : vector<1xf32>
      %29 = vector.multi_reduction <add>, %28, %cst_15 [1, 2] : vector<1x4x4xf32> to vector<1xf32>
      %30 = vector.shape_cast %29 : vector<1xf32> to vector<1x1x1xf32>
      %31 = vector.extract %30[0, 0, 0] : f32 from vector<1x1x1xf32>
      %32 = arith.addf %27, %31 : f32
      %c0_16 = arith.constant 0 : index
      %c0_17 = arith.constant 0 : index
      %33 = memref.load %arg5[%c0_16, %c0_17] : memref<1x1xf32, #tpu.memory_space<smem>>
      memref.store %32, %arg5[%c0_16, %c0_17] : memref<1x1xf32, #tpu.memory_space<smem>>
    } else {
    }
    %25 = arith.extui %21 : i1 to i32
    %c0_i32_12 = arith.constant 0 : i32
    %26 = arith.cmpi ne, %25, %c0_i32_12 : i32
    scf.if %26 {
      %27 = tpu.iota {dimensions = array<i32: 0>} : vector<4x4xi32>
      %c4_i32_13 = arith.constant 4 : i32
      %28 = arith.muli %18, %c4_i32_13 : i32
      %29 = vector.broadcast %28 : i32 to vector<4x4xi32>
      %30 = arith.addi %29, %27 : vector<4x4xi32>
      %c4_i32_14 = arith.constant 4 : i32
      %31 = vector.broadcast %c4_i32_14 : i32 to vector<4x4xi32>
      %32 = arith.cmpi slt, %30, %31 : vector<4x4xi32>
      %c0_15 = arith.constant 0 : index
      %c0_16 = arith.constant 0 : index
      %33 = memref.load %arg5[%c0_15, %c0_16] : memref<1x1xf32, #tpu.memory_space<smem>>
      %cst_17 = arith.constant 0.000000e+00 : f32
      %34 = vector.broadcast %cst_17 : f32 to vector<4x4xf32>
      %35 = arith.select %32, %16, %34 : vector<4x4xi1>, vector<4x4xf32>
      %36 = vector.shape_cast %35 : vector<4x4xf32> to vector<1x4x4xf32>
      %cst_18 = arith.constant dense<0.000000e+00> : vector<1xf32>
      %37 = vector.multi_reduction <add>, %36, %cst_18 [1, 2] : vector<1x4x4xf32> to vector<1xf32>
      %38 = vector.shape_cast %37 : vector<1xf32> to vector<1x1x1xf32>
      %39 = vector.extract %38[0, 0, 0] : f32 from vector<1x1x1xf32>
      %40 = arith.addf %33, %39 : f32
      %c0_19 = arith.constant 0 : index
      %c0_20 = arith.constant 0 : index
      %41 = memref.load %arg5[%c0_19, %c0_20] : memref<1x1xf32, #tpu.memory_space<smem>>
      memref.store %40, %arg5[%c0_19, %c0_20] : memref<1x1xf32, #tpu.memory_space<smem>>
    } else {
    }
    return
  }
  func.func @transform_0(%arg0: i32, %arg1: i32) -> (i32, i32) {
    %c1_i32 = arith.constant 1 : i32
    %0 = arith.muli %arg0, %c1_i32 : i32
    %1 = arith.addi %0, %arg1 : i32
    %c0_i32 = arith.constant 0 : i32
    %2 = arith.minsi %1, %c0_i32 : i32
    %c0_i32_0 = arith.constant 0 : i32
    %c0_i32_1 = arith.constant 0 : i32
    return %2, %c0_i32_0 : i32, i32
  }
  func.func @transform_1(%arg0: i32, %arg1: i32) -> (i32, i32) {
    %c1_i32 = arith.constant 1 : i32
    %0 = arith.muli %arg0, %c1_i32 : i32
    %1 = arith.addi %0, %arg1 : i32
    %c0_i32 = arith.constant 0 : i32
    %2 = arith.minsi %1, %c0_i32 : i32
    %c0_i32_0 = arith.constant 0 : i32
    %c0_i32_1 = arith.constant 0 : i32
    return %2, %c0_i32_0 : i32, i32
  }
  func.func @transform_2(%arg0: i32, %arg1: i32) -> (i32, i32) {
    %c0_i32 = arith.constant 0 : i32
    %c0_i32_0 = arith.constant 0 : i32
    %c0_i32_1 = arith.constant 0 : i32
    return %c0_i32, %c0_i32_0 : i32, i32
  }
  func.func @transform_3(%arg0: i32, %arg1: i32) -> (i32, i32) {
    %c0_i32 = arith.constant 0 : i32
    %c0_i32_0 = arith.constant 0 : i32
    return %arg0, %c0_i32 : i32, i32
  }
}

</mosaic_0001>

<llo_original>
// kernel: tpu_custom_call.1
$region0: #{tpu_custom_call.1}
  #allocation0 [shape = 'u32[]', space=smem, size = 0x4, offset = 0x4, fixed_abs, tag = 'smem constant byte address 0x4 - core index']
  #allocation1 [shape = 'u32[144,128]{1,0:T(1,128)}', space=vmem, size = 0x12000, scoped, tag = 'internal scratch']
  %s0 = inlined_call_operand.vmem [shape: f32[4,128], index: 0, kind: input, shape index: {}]
  %s1 = inlined_call_operand.vmem [shape: f32[4,128], index: 1, kind: input, shape index: {}]
  %s2 = inlined_call_operand.vmem [shape: f32[128,4], index: 2, kind: input, shape index: {}]
  %s3 = inlined_call_operand.hbm [shape: f32[1,1], index: 3, kind: output, shape index: {}]
  %s4 = sld [smem:[#allocation0]]
  $region34: #{tpu_custom_call.1} parent=0
    _
  %s6 = ssub.s32 1, %s4
  %s7 = scalar_select 0, %s6, %s4
  $region1: #{tpu_custom_call.1} parent=0
    #allocation2 [shape = 'u8[512]{0}', space=smem, size = 0x200, scoped, tag = 'output window, operand 0, single buffered']
    #allocation3 [shape = 's32[1]{0}', space=sflag, size = 0x4, scoped, tag = 'scoped memory for tpu_custom_call.1']
    %8 = vsyncpa [#allocation3], 0
    // Predicated region
    $region2: #{tpu_custom_call.1} parent=1 // pred_check
      _
    $region3: #{tpu_custom_call.1} parent=1 // pred_check_branch
      %10 = sbr.rel (0) target = $region5
    $region4: #{tpu_custom_call.1} parent=1 // pred_region
      %s11 = sadd.s32 0, 0
      %p12 = scmp.lt.s32.totalorder %s11, 0
      %s13 = scalar_select %p12, %s11, 0
      %p14 = scmp.lt.s32.totalorder %s13, 0
      %s15 = scalar_select %p14, %s13, 0
      %s16 = smul.addr %s15, 4
      %s17 = scalar_lea.vmem %s0, %s16
      %s18 = sadd.s32 0, 0
      %p19 = scmp.lt.s32.totalorder %s18, 0
      %s20 = scalar_select %p19, %s18, 0
    $region5: #{tpu_custom_call.1} parent=1 // pred_fallthru
      _
    // Predicated region
    $region6: #{tpu_custom_call.1} parent=1 // pred_check
      _
    $region7: #{tpu_custom_call.1} parent=1 // pred_check_branch
      %22 = sbr.rel (0) target = $region9
    $region8: #{tpu_custom_call.1} parent=1 // pred_region
      %s23 = sadd.s32 0, 0
      %p24 = scmp.lt.s32.totalorder %s23, 0
      %s25 = scalar_select %p24, %s23, 0
      %p26 = scmp.lt.s32.totalorder %s25, 0
      %s27 = scalar_select %p26, %s25, 0
      %s28 = smul.addr %s27, 4
      %s29 = scalar_lea.vmem %s1, %s28
      %s30 = sadd.s32 0, 0
      %p31 = scmp.lt.s32.totalorder %s30, 0
      %s32 = scalar_select %p31, %s30, 0
    $region9: #{tpu_custom_call.1} parent=1 // pred_fallthru
      _
    // Predicated region
    $region10: #{tpu_custom_call.1} parent=1 // pred_check
      _
    $region11: #{tpu_custom_call.1} parent=1 // pred_check_branch
      %34 = sbr.rel (0) target = $region13
    $region12: #{tpu_custom_call.1} parent=1 // pred_region
      _
    $region13: #{tpu_custom_call.1} parent=1 // pred_fallthru
      _
    %s35 = sadd.s32 0, 0
    %p36 = scmp.lt.s32.totalorder %s35, 0
    %s37 = scalar_select %p36, %s35, 0
    %p38 = scmp.lt.s32.totalorder %s37, 0
    %s39 = scalar_select %p38, %s37, 0
    %s40 = smul.addr %s39, 4
    %s41 = scalar_lea.vmem %s0, %s40
    %s42 = sadd.s32 0, 0
    %p43 = scmp.lt.s32.totalorder %s42, 0
    %s44 = scalar_select %p43, %s42, 0
    %p45 = scmp.lt.s32.totalorder %s44, 0
    %s46 = scalar_select %p45, %s44, 0
    %s47 = smul.addr %s46, 4
    %s48 = scalar_lea.vmem %s1, %s47
    %s49 = sadd.s32 0, 0
    %p50 = scmp.lt.s32.totalorder %s49, 0
    %s51 = scalar_select %p50, %s49, 0
    %p52 = scmp.lt.s32.totalorder %s51, 0
    %s53 = scalar_select %p52, %s51, 0
    %s54 = smul.addr %s53, 4
    %s55 = scalar_lea.vmem %s0, %s54
    %s56 = sadd.s32 0, 0
    %p57 = scmp.lt.s32.totalorder %s56, 0
    %s58 = scalar_select %p57, %s56, 0
    %s59 = sadd.s32 0, 0
    %p60 = scmp.lt.s32.totalorder %s59, 0
    %s61 = scalar_select %p60, %s59, 0
    %p62 = scmp.lt.s32.totalorder %s61, 0
    %s63 = scalar_select %p62, %s61, 0
    %s64 = smul.addr %s63, 4
    %s65 = scalar_lea.vmem %s1, %s64
    %s66 = sadd.s32 0, 0
    %p67 = scmp.lt.s32.totalorder %s66, 0
    %s68 = scalar_select %p67, %s66, 0
    %p69 = scmp.eq.s32.totalorder 0, 0
    // Predicated region
    $region14: #{tpu_custom_call.1} parent=1 // pred_check
      %p70 = pneg %p69
    $region15: #{tpu_custom_call.1} parent=1 // pred_check_branch
      %72 = sbr.rel (%p70) target = $region17
    $region16: #{tpu_custom_call.1} parent=1 // pred_region
      %s73 = scalar_lea.smem [#allocation2], 0
      %74 = sst [smem:[%s73]] 0.0
    $region17: #{tpu_custom_call.1} parent=1 // pred_fallthru
      _
    %v75 = vld [vmem:[%s55] sm:$0xf]
    %v76 = vld [vmem:[%s65] sm:$0xf]
    %v77 = vld [vmem:[%s2] sm:$0xff]
    %v78 = vld [vmem:[%s2 + $0x8] sm:$0xff]
    %v79 = vld [vmem:[%s2 + $0x10] sm:$0xff]
    %v80 = vld [vmem:[%s2 + $0x18] sm:$0xff]
    %v81 = vld [vmem:[%s2 + $0x20] sm:$0xff]
    %v82 = vld [vmem:[%s2 + $0x28] sm:$0xff]
    %v83 = vld [vmem:[%s2 + $0x30] sm:$0xff]
    %v84 = vld [vmem:[%s2 + $0x38] sm:$0xff]
    %v85 = vld [vmem:[%s2 + $0x40] sm:$0xff]
    %v86 = vld [vmem:[%s2 + $0x48] sm:$0xff]
    %v87 = vld [vmem:[%s2 + $0x50] sm:$0xff]
    %v88 = vld [vmem:[%s2 + $0x58] sm:$0xff]
    %v89 = vld [vmem:[%s2 + $0x60] sm:$0xff]
    %v90 = vld [vmem:[%s2 + $0x68] sm:$0xff]
    %v91 = vld [vmem:[%s2 + $0x70] sm:$0xff]
    %v92 = vld [vmem:[%s2 + $0x78] sm:$0xff]
    %v93 = vmul.f32 %v75, %v76
    %94 = vmatprep.subr.mxu0 0.0
    %v95 = vand.u32 %v92, 4294901760
    %96 = vmatpush1.msra.mxu0 %v95
    %97 = vmatprep.subr.mxu0 0.0
    %v98 = vand.u32 %v91, 4294901760
    %99 = vmatpush1.msra.mxu0 %v98
    %100 = vmatprep.subr.mxu0 0.0
    %v101 = vand.u32 %v90, 4294901760
    %102 = vmatpush1.msra.mxu0 %v101
    %103 = vmatprep.subr.mxu0 0.0
    %v104 = vand.u32 %v89, 4294901760
    %105 = vmatpush1.msra.mxu0 %v104
    %106 = vmatprep.subr.mxu0 0.0
    %v107 = vand.u32 %v88, 4294901760
    %108 = vmatpush1.msra.mxu0 %v107
    %109 = vmatprep.subr.mxu0 0.0
    %v110 = vand.u32 %v87, 4294901760
    %111 = vmatpush1.msra.mxu0 %v110
    %112 = vmatprep.subr.mxu0 0.0
    %v113 = vand.u32 %v86, 4294901760
    %114 = vmatpush1.msra.mxu0 %v113
    %115 = vmatprep.subr.mxu0 0.0
    %v116 = vand.u32 %v85, 4294901760
    %117 = vmatpush1.msra.mxu0 %v116
    %118 = vmatprep.subr.mxu0 0.0
    %v119 = vand.u32 %v84, 4294901760
    %120 = vmatpush1.msra.mxu0 %v119
    %121 = vmatprep.subr.mxu0 0.0
    %v122 = vand.u32 %v83, 4294901760
    %123 = vmatpush1.msra.mxu0 %v122
    %124 = vmatprep.subr.mxu0 0.0
    %v125 = vand.u32 %v82, 4294901760
    %126 = vmatpush1.msra.mxu0 %v125
    %127 = vmatprep.subr.mxu0 0.0
    %v128 = vand.u32 %v81, 4294901760
    %129 = vmatpush1.msra.mxu0 %v128
    %130 = vmatprep.subr.mxu0 0.0
    %v131 = vand.u32 %v80, 4294901760
    %132 = vmatpush1.msra.mxu0 %v131
    %133 = vmatprep.subr.mxu0 0.0
    %v134 = vand.u32 %v79, 4294901760
    %135 = vmatpush1.msra.mxu0 %v134
    %136 = vmatprep.subr.mxu0 0.0
    %v137 = vand.u32 %v78, 4294901760
    %138 = vmatpush1.msra.mxu0 %v137
    %139 = vmatprep.subr.mxu0 0.0
    %v140 = vand.u32 %v77, 4294901760
    %141 = vmatpush1.msra.mxu0 %v140
    %142 = vmatprep.subr.mxu0 0.0
    %143 = vmatpush2.msra.mxu0 0.0
    %144 = vmatprep.subr.mxu0 0.0
    %145 = vmatpush2.msra.mxu0 0.0
    %146 = vmatprep.subr.mxu0 0.0
    %147 = vmatpush2.msra.mxu0 0.0
    %148 = vmatprep.subr.mxu0 0.0
    %149 = vmatpush2.msra.mxu0 0.0
    %150 = vmatprep.subr.mxu0 0.0
    %151 = vmatpush2.msra.mxu0 0.0
    %152 = vmatprep.subr.mxu0 0.0
    %153 = vmatpush2.msra.mxu0 0.0
    %154 = vmatprep.subr.mxu0 0.0
    %155 = vmatpush2.msra.mxu0 0.0
    %156 = vmatprep.subr.mxu0 0.0
    %157 = vmatpush2.msra.mxu0 0.0
    %158 = vmatprep.subr.mxu0 0.0
    %159 = vmatpush2.msra.mxu0 0.0
    %160 = vmatprep.subr.mxu0 0.0
    %161 = vmatpush2.msra.mxu0 0.0
    %162 = vmatprep.subr.mxu0 0.0
    %163 = vmatpush2.msra.mxu0 0.0
    %164 = vmatprep.subr.mxu0 0.0
    %165 = vmatpush2.msra.mxu0 0.0
    %166 = vmatprep.subr.mxu0 0.0
    %167 = vmatpush2.msra.mxu0 0.0
    %168 = vmatprep.subr.mxu0 0.0
    %169 = vmatpush2.msra.mxu0 0.0
    %170 = vmatprep.subr.mxu0 0.0
    %171 = vmatpush2.msra.mxu0 0.0
    %172 = vmatprep.subr.mxu0 0.0
    %173 = vmatpush2.msra.mxu0 0.0
    %174 = vmatprep.mubr.f32.mxu0 0.0
    %v175 = vand.u32 %v93, 4294901760
    %v176 = vsub.f32 %v93, %v175
    %v177 = vand.u32 %v176, 4294901760
    %v178 = vsub.f32 %v176, %v177
    %v179 = vand.u32 %v178, 4294901760
    %180 = vmatmul.mubr.f32.gmra.mxu0 %v179
    %v181 = vpop.f32.mrf.mxu0
    %v182 = vadd.f32 0.0, %v181
    %v183 = vpop.f32.mrf.mxu0
    %184 = vdwg.mxu0
    %185 = vmatprep.subr.mxu0 0.0
    %v186 = vand.u32 %v92, 4294901760
    %v187 = vsub.f32 %v92, %v186
    %v188 = vand.u32 %v187, 4294901760
    %v189 = vsub.f32 %v187, %v188
    %v190 = vand.u32 %v189, 4294901760
    %191 = vmatpush1.msra.mxu0 %v190
    %192 = vmatprep.subr.mxu0 0.0
    %v193 = vand.u32 %v91, 4294901760
    %v194 = vsub.f32 %v91, %v193
    %v195 = vand.u32 %v194, 4294901760
    %v196 = vsub.f32 %v194, %v195
    %v197 = vand.u32 %v196, 4294901760
    %198 = vmatpush1.msra.mxu0 %v197
    %199 = vmatprep.subr.mxu0 0.0
    %v200 = vand.u32 %v90, 4294901760
    %v201 = vsub.f32 %v90, %v200
    %v202 = vand.u32 %v201, 4294901760
    %v203 = vsub.f32 %v201, %v202
    %v204 = vand.u32 %v203, 4294901760
    %205 = vmatpush1.msra.mxu0 %v204
    %206 = vmatprep.subr.mxu0 0.0
    %v207 = vand.u32 %v89, 4294901760
    %v208 = vsub.f32 %v89, %v207
    %v209 = vand.u32 %v208, 4294901760
    %v210 = vsub.f32 %v208, %v209
    %v211 = vand.u32 %v210, 4294901760
    %212 = vmatpush1.msra.mxu0 %v211
    %213 = vmatprep.subr.mxu0 0.0
    %v214 = vand.u32 %v88, 4294901760
    %v215 = vsub.f32 %v88, %v214
    %v216 = vand.u32 %v215, 4294901760
    %v217 = vsub.f32 %v215, %v216
    %v218 = vand.u32 %v217, 4294901760
    %219 = vmatpush1.msra.mxu0 %v218
    %220 = vmatprep.subr.mxu0 0.0
    %v221 = vand.u32 %v87, 4294901760
    %v222 = vsub.f32 %v87, %v221
    %v223 = vand.u32 %v222, 4294901760
    %v224 = vsub.f32 %v222, %v223
    %v225 = vand.u32 %v224, 4294901760
    %226 = vmatpush1.msra.mxu0 %v225
    %227 = vmatprep.subr.mxu0 0.0
    %v228 = vand.u32 %v86, 4294901760
    %v229 = vsub.f32 %v86, %v228
    %v230 = vand.u32 %v229, 4294901760
    %v231 = vsub.f32 %v229, %v230
    %v232 = vand.u32 %v231, 4294901760
    %233 = vmatpush1.msra.mxu0 %v232
    %234 = vmatprep.subr.mxu0 0.0
    %v235 = vand.u32 %v85, 4294901760
    %v236 = vsub.f32 %v85, %v235
    %v237 = vand.u32 %v236, 4294901760
    %v238 = vsub.f32 %v236, %v237
    %v239 = vand.u32 %v238, 4294901760
    %240 = vmatpush1.msra.mxu0 %v239
    %241 = vmatprep.subr.mxu0 0.0
    %v242 = vand.u32 %v84, 4294901760
    %v243 = vsub.f32 %v84, %v242
    %v244 = vand.u32 %v243, 4294901760
    %v245 = vsub.f32 %v243, %v244
    %v246 = vand.u32 %v245, 4294901760
    %247 = vmatpush1.msra.mxu0 %v246
    %248 = vmatprep.subr.mxu0 0.0
    %v249 = vand.u32 %v83, 4294901760
    %v250 = vsub.f32 %v83, %v249
    %v251 = vand.u32 %v250, 4294901760
    %v252 = vsub.f32 %v250, %v251
    %v253 = vand.u32 %v252, 4294901760
    %254 = vmatpush1.msra.mxu0 %v253
    %255 = vmatprep.subr.mxu0 0.0
    %v256 = vand.u32 %v82, 4294901760
    %v257 = vsub.f32 %v82, %v256
    %v258 = vand.u32 %v257, 4294901760
    %v259 = vsub.f32 %v257, %v258
    %v260 = vand.u32 %v259, 4294901760
    %261 = vmatpush1.msra.mxu0 %v260
    %262 = vmatprep.subr.mxu0 0.0
    %v263 = vand.u32 %v81, 4294901760
    %v264 = vsub.f32 %v81, %v263
    %v265 = vand.u32 %v264, 4294901760
    %v266 = vsub.f32 %v264, %v265
    %v267 = vand.u32 %v266, 4294901760
    %268 = vmatpush1.msra.mxu0 %v267
    %269 = vmatprep.subr.mxu0 0.0
    %v270 = vand.u32 %v80, 4294901760
    %v271 = vsub.f32 %v80, %v270
    %v272 = vand.u32 %v271, 4294901760
    %v273 = vsub.f32 %v271, %v272
    %v274 = vand.u32 %v273, 4294901760
    %275 = vmatpush1.msra.mxu0 %v274
    %276 = vmatprep.subr.mxu0 0.0
    %v277 = vand.u32 %v79, 4294901760
    %v278 = vsub.f32 %v79, %v277
    %v279 = vand.u32 %v278, 4294901760
    %v280 = vsub.f32 %v278, %v279
    %v281 = vand.u32 %v280, 4294901760
    %282 = vmatpush1.msra.mxu0 %v281
    %283 = vmatprep.subr.mxu0 0.0
    %v284 = vand.u32 %v78, 4294901760
    %v285 = vsub.f32 %v78, %v284
    %v286 = vand.u32 %v285, 4294901760
    %v287 = vsub.f32 %v285, %v286
    %v288 = vand.u32 %v287, 4294901760
    %289 = vmatpush1.msra.mxu0 %v288
    %290 = vmatprep.subr.mxu0 0.0
    %v291 = vand.u32 %v77, 4294901760
    %v292 = vsub.f32 %v77, %v291
    %v293 = vand.u32 %v292, 4294901760
    %v294 = vsub.f32 %v292, %v293
    %v295 = vand.u32 %v294, 4294901760
    %296 = vmatpush1.msra.mxu0 %v295
    %297 = vmatprep.subr.mxu0 0.0
    %298 = vmatpush2.msra.mxu0 0.0
    %299 = vmatprep.subr.mxu0 0.0
    %300 = vmatpush2.msra.mxu0 0.0
    %301 = vmatprep.subr.mxu0 0.0
    %302 = vmatpush2.msra.mxu0 0.0
    %303 = vmatprep.subr.mxu0 0.0
    %304 = vmatpush2.msra.mxu0 0.0
    %305 = vmatprep.subr.mxu0 0.0
    %306 = vmatpush2.msra.mxu0 0.0
    %307 = vmatprep.subr.mxu0 0.0
    %308 = vmatpush2.msra.mxu0 0.0
    %309 = vmatprep.subr.mxu0 0.0
    %310 = vmatpush2.msra.mxu0 0.0
    %311 = vmatprep.subr.mxu0 0.0
    %312 = vmatpush2.msra.mxu0 0.0
    %313 = vmatprep.subr.mxu0 0.0
    %314 = vmatpush2.msra.mxu0 0.0
    %315 = vmatprep.subr.mxu0 0.0
    %316 = vmatpush2.msra.mxu0 0.0
    %317 = vmatprep.subr.mxu0 0.0
    %318 = vmatpush2.msra.mxu0 0.0
    %319 = vmatprep.subr.mxu0 0.0
    %320 = vmatpush2.msra.mxu0 0.0
    %321 = vmatprep.subr.mxu0 0.0
    %322 = vmatpush2.msra.mxu0 0.0
    %323 = vmatprep.subr.mxu0 0.0
    %324 = vmatpush2.msra.mxu0 0.0
    %325 = vmatprep.subr.mxu0 0.0
    %326 = vmatpush2.msra.mxu0 0.0
    %327 = vmatprep.subr.mxu0 0.0
    %328 = vmatpush2.msra.mxu0 0.0
    %329 = vmatprep.mubr.f32.mxu0 0.0
    %v330 = vand.u32 %v93, 4294901760
    %331 = vmatmul.mubr.f32.gmra.mxu0 %v330
    %v332 = vpop.f32.mrf.mxu0
    %v333 = vadd.f32 %v182, %v332
    %v334 = vpop.f32.mrf.mxu0
    %335 = vdwg.mxu0
    %336 = vmatprep.subr.mxu0 0.0
    %v337 = vand.u32 %v92, 4294901760
    %v338 = vsub.f32 %v92, %v337
    %339 = vmatpush1.msra.mxu0 %v338
    %340 = vmatprep.subr.mxu0 0.0
    %v341 = vand.u32 %v91, 4294901760
    %v342 = vsub.f32 %v91, %v341
    %343 = vmatpush1.msra.mxu0 %v342
    %344 = vmatprep.subr.mxu0 0.0
    %v345 = vand.u32 %v90, 4294901760
    %v346 = vsub.f32 %v90, %v345
    %347 = vmatpush1.msra.mxu0 %v346
    %348 = vmatprep.subr.mxu0 0.0
    %v349 = vand.u32 %v89, 4294901760
    %v350 = vsub.f32 %v89, %v349
    %351 = vmatpush1.msra.mxu0 %v350
    %352 = vmatprep.subr.mxu0 0.0
    %v353 = vand.u32 %v88, 4294901760
    %v354 = vsub.f32 %v88, %v353
    %355 = vmatpush1.msra.mxu0 %v354
    %356 = vmatprep.subr.mxu0 0.0
    %v357 = vand.u32 %v87, 4294901760
    %v358 = vsub.f32 %v87, %v357
    %359 = vmatpush1.msra.mxu0 %v358
    %360 = vmatprep.subr.mxu0 0.0
    %v361 = vand.u32 %v86, 4294901760
    %v362 = vsub.f32 %v86, %v361
    %363 = vmatpush1.msra.mxu0 %v362
    %364 = vmatprep.subr.mxu0 0.0
    %v365 = vand.u32 %v85, 4294901760
    %v366 = vsub.f32 %v85, %v365
    %367 = vmatpush1.msra.mxu0 %v366
    %368 = vmatprep.subr.mxu0 0.0
    %v369 = vand.u32 %v84, 4294901760
    %v370 = vsub.f32 %v84, %v369
    %371 = vmatpush1.msra.mxu0 %v370
    %372 = vmatprep.subr.mxu0 0.0
    %v373 = vand.u32 %v83, 4294901760
    %v374 = vsub.f32 %v83, %v373
    %375 = vmatpush1.msra.mxu0 %v374
    %376 = vmatprep.subr.mxu0 0.0
    %v377 = vand.u32 %v82, 4294901760
    %v378 = vsub.f32 %v82, %v377
    %379 = vmatpush1.msra.mxu0 %v378
    %380 = vmatprep.subr.mxu0 0.0
    %v381 = vand.u32 %v81, 4294901760
    %v382 = vsub.f32 %v81, %v381
    %383 = vmatpush1.msra.mxu0 %v382
    %384 = vmatprep.subr.mxu0 0.0
    %v385 = vand.u32 %v80, 4294901760
    %v386 = vsub.f32 %v80, %v385
    %387 = vmatpush1.msra.mxu0 %v386
    %388 = vmatprep.subr.mxu0 0.0
    %v389 = vand.u32 %v79, 4294901760
    %v390 = vsub.f32 %v79, %v389
    %391 = vmatpush1.msra.mxu0 %v390
    %392 = vmatprep.subr.mxu0 0.0
    %v393 = vand.u32 %v78, 4294901760
    %v394 = vsub.f32 %v78, %v393
    %395 = vmatpush1.msra.mxu0 %v394
    %396 = vmatprep.subr.mxu0 0.0
    %v397 = vand.u32 %v77, 4294901760
    %v398 = vsub.f32 %v77, %v397
    %399 = vmatpush1.msra.mxu0 %v398
    %400 = vmatprep.subr.mxu0 0.0
    %401 = vmatpush2.msra.mxu0 0.0
    %402 = vmatprep.subr.mxu0 0.0
    %403 = vmatpush2.msra.mxu0 0.0
    %404 = vmatprep.subr.mxu0 0.0
    %405 = vmatpush2.msra.mxu0 0.0
    %406 = vmatprep.subr.mxu0 0.0
    %407 = vmatpush2.msra.mxu0 0.0
    %408 = vmatprep.subr.mxu0 0.0
    %409 = vmatpush2.msra.mxu0 0.0
    %410 = vmatprep.subr.mxu0 0.0
    %411 = vmatpush2.msra.mxu0 0.0
    %412 = vmatprep.subr.mxu0 0.0
    %413 = vmatpush2.msra.mxu0 0.0
    %414 = vmatprep.subr.mxu0 0.0
    %415 = vmatpush2.msra.mxu0 0.0
    %416 = vmatprep.subr.mxu0 0.0
    %417 = vmatpush2.msra.mxu0 0.0
    %418 = vmatprep.subr.mxu0 0.0
    %419 = vmatpush2.msra.mxu0 0.0
    %420 = vmatprep.subr.mxu0 0.0
    %421 = vmatpush2.msra.mxu0 0.0
    %422 = vmatprep.subr.mxu0 0.0
    %423 = vmatpush2.msra.mxu0 0.0
    %424 = vmatprep.subr.mxu0 0.0
    %425 = vmatpush2.msra.mxu0 0.0
    %426 = vmatprep.subr.mxu0 0.0
    %427 = vmatpush2.msra.mxu0 0.0
    %428 = vmatprep.subr.mxu0 0.0
    %429 = vmatpush2.msra.mxu0 0.0
    %430 = vmatprep.subr.mxu0 0.0
    %431 = vmatpush2.msra.mxu0 0.0
    %432 = vmatprep.mubr.f32.mxu0 0.0
    %v433 = vand.u32 %v93, 4294901760
    %v434 = vsub.f32 %v93, %v433
    %435 = vmatmul.mubr.f32.gmra.mxu0 %v434
    %v436 = vpop.f32.mrf.mxu0
    %v437 = vadd.f32 %v333, %v436
    %v438 = vpop.f32.mrf.mxu0
    %439 = vdwg.mxu0
    %440 = vmatprep.subr.mxu0 0.0
    %v441 = vand.u32 %v92, 4294901760
    %442 = vmatpush1.msra.mxu0 %v441
    %443 = vmatprep.subr.mxu0 0.0
    %v444 = vand.u32 %v91, 4294901760
    %445 = vmatpush1.msra.mxu0 %v444
    %446 = vmatprep.subr.mxu0 0.0
    %v447 = vand.u32 %v90, 4294901760
    %448 = vmatpush1.msra.mxu0 %v447
    %449 = vmatprep.subr.mxu0 0.0
    %v450 = vand.u32 %v89, 4294901760
    %451 = vmatpush1.msra.mxu0 %v450
    %452 = vmatprep.subr.mxu0 0.0
    %v453 = vand.u32 %v88, 4294901760
    %454 = vmatpush1.msra.mxu0 %v453
    %455 = vmatprep.subr.mxu0 0.0
    %v456 = vand.u32 %v87, 4294901760
    %457 = vmatpush1.msra.mxu0 %v456
    %458 = vmatprep.subr.mxu0 0.0
    %v459 = vand.u32 %v86, 4294901760
    %460 = vmatpush1.msra.mxu0 %v459
    %461 = vmatprep.subr.mxu0 0.0
    %v462 = vand.u32 %v85, 4294901760
    %463 = vmatpush1.msra.mxu0 %v462
    %464 = vmatprep.subr.mxu0 0.0
    %v465 = vand.u32 %v84, 4294901760
    %466 = vmatpush1.msra.mxu0 %v465
    %467 = vmatprep.subr.mxu0 0.0
    %v468 = vand.u32 %v83, 4294901760
    %469 = vmatpush1.msra.mxu0 %v468
    %470 = vmatprep.subr.mxu0 0.0
    %v471 = vand.u32 %v82, 4294901760
    %472 = vmatpush1.msra.mxu0 %v471
    %473 = vmatprep.subr.mxu0 0.0
    %v474 = vand.u32 %v81, 4294901760
    %475 = vmatpush1.msra.mxu0 %v474
    %476 = vmatprep.subr.mxu0 0.0
    %v477 = vand.u32 %v80, 4294901760
    %478 = vmatpush1.msra.mxu0 %v477
    %479 = vmatprep.subr.mxu0 0.0
    %v480 = vand.u32 %v79, 4294901760
    %481 = vmatpush1.msra.mxu0 %v480
    %482 = vmatprep.subr.mxu0 0.0
    %v483 = vand.u32 %v78, 4294901760
    %484 = vmatpush1.msra.mxu0 %v483
    %485 = vmatprep.subr.mxu0 0.0
    %v486 = vand.u32 %v77, 4294901760
    %487 = vmatpush1.msra.mxu0 %v486
    %488 = vmatprep.subr.mxu0 0.0
    %489 = vmatpush2.msra.mxu0 0.0
    %490 = vmatprep.subr.mxu0 0.0
    %491 = vmatpush2.msra.mxu0 0.0
    %492 = vmatprep.subr.mxu0 0.0
    %493 = vmatpush2.msra.mxu0 0.0
    %494 = vmatprep.subr.mxu0 0.0
    %495 = vmatpush2.msra.mxu0 0.0
    %496 = vmatprep.subr.mxu0 0.0
    %497 = vmatpush2.msra.mxu0 0.0
    %498 = vmatprep.subr.mxu0 0.0
    %499 = vmatpush2.msra.mxu0 0.0
    %500 = vmatprep.subr.mxu0 0.0
    %501 = vmatpush2.msra.mxu0 0.0
    %502 = vmatprep.subr.mxu0 0.0
    %503 = vmatpush2.msra.mxu0 0.0
    %504 = vmatprep.subr.mxu0 0.0
    %505 = vmatpush2.msra.mxu0 0.0
    %506 = vmatprep.subr.mxu0 0.0
    %507 = vmatpush2.msra.mxu0 0.0
    %508 = vmatprep.subr.mxu0 0.0
    %509 = vmatpush2.msra.mxu0 0.0
    %510 = vmatprep.subr.mxu0 0.0
    %511 = vmatpush2.msra.mxu0 0.0
    %512 = vmatprep.subr.mxu0 0.0
    %513 = vmatpush2.msra.mxu0 0.0
    %514 = vmatprep.subr.mxu0 0.0
    %515 = vmatpush2.msra.mxu0 0.0
    %516 = vmatprep.subr.mxu0 0.0
    %517 = vmatpush2.msra.mxu0 0.0
    %518 = vmatprep.subr.mxu0 0.0
    %519 = vmatpush2.msra.mxu0 0.0
    %520 = vmatprep.mubr.f32.mxu0 0.0
    %v521 = vand.u32 %v93, 4294901760
    %v522 = vsub.f32 %v93, %v521
    %v523 = vand.u32 %v522, 4294901760
    %524 = vmatmul.mubr.f32.gmra.mxu0 %v523
    %v525 = vpop.f32.mrf.mxu0
    %v526 = vadd.f32 %v437, %v525
    %v527 = vpop.f32.mrf.mxu0
    %528 = vdwg.mxu0
    %529 = vmatprep.subr.mxu0 0.0
    %v530 = vand.u32 %v92, 4294901760
    %v531 = vsub.f32 %v92, %v530
    %v532 = vand.u32 %v531, 4294901760
    %533 = vmatpush1.msra.mxu0 %v532
    %534 = vmatprep.subr.mxu0 0.0
    %v535 = vand.u32 %v91, 4294901760
    %v536 = vsub.f32 %v91, %v535
    %v537 = vand.u32 %v536, 4294901760
    %538 = vmatpush1.msra.mxu0 %v537
    %539 = vmatprep.subr.mxu0 0.0
    %v540 = vand.u32 %v90, 4294901760
    %v541 = vsub.f32 %v90, %v540
    %v542 = vand.u32 %v541, 4294901760
    %543 = vmatpush1.msra.mxu0 %v542
    %544 = vmatprep.subr.mxu0 0.0
    %v545 = vand.u32 %v89, 4294901760
    %v546 = vsub.f32 %v89, %v545
    %v547 = vand.u32 %v546, 4294901760
    %548 = vmatpush1.msra.mxu0 %v547
    %549 = vmatprep.subr.mxu0 0.0
    %v550 = vand.u32 %v88, 4294901760
    %v551 = vsub.f32 %v88, %v550
    %v552 = vand.u32 %v551, 4294901760
    %553 = vmatpush1.msra.mxu0 %v552
    %554 = vmatprep.subr.mxu0 0.0
    %v555 = vand.u32 %v87, 4294901760
    %v556 = vsub.f32 %v87, %v555
    %v557 = vand.u32 %v556, 4294901760
    %558 = vmatpush1.msra.mxu0 %v557
    %559 = vmatprep.subr.mxu0 0.0
    %v560 = vand.u32 %v86, 4294901760
    %v561 = vsub.f32 %v86, %v560
    %v562 = vand.u32 %v561, 4294901760
    %563 = vmatpush1.msra.mxu0 %v562
    %564 = vmatprep.subr.mxu0 0.0
    %v565 = vand.u32 %v85, 4294901760
    %v566 = vsub.f32 %v85, %v565
    %v567 = vand.u32 %v566, 4294901760
    %568 = vmatpush1.msra.mxu0 %v567
    %569 = vmatprep.subr.mxu0 0.0
    %v570 = vand.u32 %v84, 4294901760
    %v571 = vsub.f32 %v84, %v570
    %v572 = vand.u32 %v571, 4294901760
    %573 = vmatpush1.msra.mxu0 %v572
    %574 = vmatprep.subr.mxu0 0.0
    %v575 = vand.u32 %v83, 4294901760
    %v576 = vsub.f32 %v83, %v575
    %v577 = vand.u32 %v576, 4294901760
    %578 = vmatpush1.msra.mxu0 %v577
    %579 = vmatprep.subr.mxu0 0.0
    %v580 = vand.u32 %v82, 4294901760
    %v581 = vsub.f32 %v82, %v580
    %v582 = vand.u32 %v581, 4294901760
    %583 = vmatpush1.msra.mxu0 %v582
    %584 = vmatprep.subr.mxu0 0.0
    %v585 = vand.u32 %v81, 4294901760
    %v586 = vsub.f32 %v81, %v585
    %v587 = vand.u32 %v586, 4294901760
    %588 = vmatpush1.msra.mxu0 %v587
    %589 = vmatprep.subr.mxu0 0.0
    %v590 = vand.u32 %v80, 4294901760
    %v591 = vsub.f32 %v80, %v590
    %v592 = vand.u32 %v591, 4294901760
    %593 = vmatpush1.msra.mxu0 %v592
    %594 = vmatprep.subr.mxu0 0.0
    %v595 = vand.u32 %v79, 4294901760
    %v596 = vsub.f32 %v79, %v595
    %v597 = vand.u32 %v596, 4294901760
    %598 = vmatpush1.msra.mxu0 %v597
    %599 = vmatprep.subr.mxu0 0.0
    %v600 = vand.u32 %v78, 4294901760
    %v601 = vsub.f32 %v78, %v600
    %v602 = vand.u32 %v601, 4294901760
    %603 = vmatpush1.msra.mxu0 %v602
    %604 = vmatprep.subr.mxu0 0.0
    %v605 = vand.u32 %v77, 4294901760
    %v606 = vsub.f32 %v77, %v605
    %v607 = vand.u32 %v606, 4294901760
    %608 = vmatpush1.msra.mxu0 %v607
    %609 = vmatprep.subr.mxu0 0.0
    %610 = vmatpush2.msra.mxu0 0.0
    %611 = vmatprep.subr.mxu0 0.0
    %612 = vmatpush2.msra.mxu0 0.0
    %613 = vmatprep.subr.mxu0 0.0
    %614 = vmatpush2.msra.mxu0 0.0
    %615 = vmatprep.subr.mxu0 0.0
    %616 = vmatpush2.msra.mxu0 0.0
    %617 = vmatprep.subr.mxu0 0.0
    %618 = vmatpush2.msra.mxu0 0.0
    %619 = vmatprep.subr.mxu0 0.0
    %620 = vmatpush2.msra.mxu0 0.0
    %621 = vmatprep.subr.mxu0 0.0
    %622 = vmatpush2.msra.mxu0 0.0
    %623 = vmatprep.subr.mxu0 0.0
    %624 = vmatpush2.msra.mxu0 0.0
    %625 = vmatprep.subr.mxu0 0.0
    %626 = vmatpush2.msra.mxu0 0.0
    %627 = vmatprep.subr.mxu0 0.0
    %628 = vmatpush2.msra.mxu0 0.0
    %629 = vmatprep.subr.mxu0 0.0
    %630 = vmatpush2.msra.mxu0 0.0
    %631 = vmatprep.subr.mxu0 0.0
    %632 = vmatpush2.msra.mxu0 0.0
    %633 = vmatprep.subr.mxu0 0.0
    %634 = vmatpush2.msra.mxu0 0.0
    %635 = vmatprep.subr.mxu0 0.0
    %636 = vmatpush2.msra.mxu0 0.0
    %637 = vmatprep.subr.mxu0 0.0
    %638 = vmatpush2.msra.mxu0 0.0
    %639 = vmatprep.subr.mxu0 0.0
    %640 = vmatpush2.msra.mxu0 0.0
    %641 = vmatprep.mubr.f32.mxu0 0.0
    %v642 = vand.u32 %v93, 4294901760
    %643 = vmatmul.mubr.f32.gmra.mxu0 %v642
    %v644 = vpop.f32.mrf.mxu0
    %v645 = vadd.f32 %v526, %v644
    %v646 = vpop.f32.mrf.mxu0
    %647 = vdwg.mxu0
    %648 = vmatprep.subr.mxu0 0.0
    %v649 = vand.u32 %v92, 4294901760
    %650 = vmatpush1.msra.mxu0 %v649
    %651 = vmatprep.subr.mxu0 0.0
    %v652 = vand.u32 %v91, 4294901760
    %653 = vmatpush1.msra.mxu0 %v652
    %654 = vmatprep.subr.mxu0 0.0
    %v655 = vand.u32 %v90, 4294901760
    %656 = vmatpush1.msra.mxu0 %v655
    %657 = vmatprep.subr.mxu0 0.0
    %v658 = vand.u32 %v89, 4294901760
    %659 = vmatpush1.msra.mxu0 %v658
    %660 = vmatprep.subr.mxu0 0.0
    %v661 = vand.u32 %v88, 4294901760
    %662 = vmatpush1.msra.mxu0 %v661
    %663 = vmatprep.subr.mxu0 0.0
    %v664 = vand.u32 %v87, 4294901760
    %665 = vmatpush1.msra.mxu0 %v664
    %666 = vmatprep.subr.mxu0 0.0
    %v667 = vand.u32 %v86, 4294901760
    %668 = vmatpush1.msra.mxu0 %v667
    %669 = vmatprep.subr.mxu0 0.0
    %v670 = vand.u32 %v85, 4294901760
    %671 = vmatpush1.msra.mxu0 %v670
    %672 = vmatprep.subr.mxu0 0.0
    %v673 = vand.u32 %v84, 4294901760
    %674 = vmatpush1.msra.mxu0 %v673
    %675 = vmatprep.subr.mxu0 0.0
    %v676 = vand.u32 %v83, 4294901760
    %677 = vmatpush1.msra.mxu0 %v676
    %678 = vmatprep.subr.mxu0 0.0
    %v679 = vand.u32 %v82, 4294901760
    %680 = vmatpush1.msra.mxu0 %v679
    %681 = vmatprep.subr.mxu0 0.0
    %v682 = vand.u32 %v81, 4294901760
    %683 = vmatpush1.msra.mxu0 %v682
    %684 = vmatprep.subr.mxu0 0.0
    %v685 = vand.u32 %v80, 4294901760
    %686 = vmatpush1.msra.mxu0 %v685
    %687 = vmatprep.subr.mxu0 0.0
    %v688 = vand.u32 %v79, 4294901760
    %689 = vmatpush1.msra.mxu0 %v688
    %690 = vmatprep.subr.mxu0 0.0
    %v691 = vand.u32 %v78, 4294901760
    %692 = vmatpush1.msra.mxu0 %v691
    %693 = vmatprep.subr.mxu0 0.0
    %v694 = vand.u32 %v77, 4294901760
    %695 = vmatpush1.msra.mxu0 %v694
    %696 = vmatprep.subr.mxu0 0.0
    %697 = vmatpush2.msra.mxu0 0.0
    %698 = vmatprep.subr.mxu0 0.0
    %699 = vmatpush2.msra.mxu0 0.0
    %700 = vmatprep.subr.mxu0 0.0
    %701 = vmatpush2.msra.mxu0 0.0
    %702 = vmatprep.subr.mxu0 0.0
    %703 = vmatpush2.msra.mxu0 0.0
    %704 = vmatprep.subr.mxu0 0.0
    %705 = vmatpush2.msra.mxu0 0.0
    %706 = vmatprep.subr.mxu0 0.0
    %707 = vmatpush2.msra.mxu0 0.0
    %708 = vmatprep.subr.mxu0 0.0
    %709 = vmatpush2.msra.mxu0 0.0
    %710 = vmatprep.subr.mxu0 0.0
    %711 = vmatpush2.msra.mxu0 0.0
    %712 = vmatprep.subr.mxu0 0.0
    %713 = vmatpush2.msra.mxu0 0.0
    %714 = vmatprep.subr.mxu0 0.0
    %715 = vmatpush2.msra.mxu0 0.0
    %716 = vmatprep.subr.mxu0 0.0
    %717 = vmatpush2.msra.mxu0 0.0
    %718 = vmatprep.subr.mxu0 0.0
    %719 = vmatpush2.msra.mxu0 0.0
    %720 = vmatprep.subr.mxu0 0.0
    %721 = vmatpush2.msra.mxu0 0.0
    %722 = vmatprep.subr.mxu0 0.0
    %723 = vmatpush2.msra.mxu0 0.0
    %724 = vmatprep.subr.mxu0 0.0
    %725 = vmatpush2.msra.mxu0 0.0
    %726 = vmatprep.subr.mxu0 0.0
    %727 = vmatpush2.msra.mxu0 0.0
    %728 = vmatprep.mubr.f32.mxu0 0.0
    %v729 = vand.u32 %v93, 4294901760
    %730 = vmatmul.mubr.f32.gmra.mxu0 %v729
    %v731 = vpop.f32.mrf.mxu0
    %v732 = vadd.f32 %v645, %v731
    %v733 = vpop.f32.mrf.mxu0
    %734 = vdwg.mxu0
    %v735 = vmul.f32 %v75, %v75
    %736 = vmatprep.subr.mxu0 0.0
    %v737 = vand.u32 %v92, 4294901760
    %738 = vmatpush1.msra.mxu0 %v737
    %739 = vmatprep.subr.mxu0 0.0
    %v740 = vand.u32 %v91, 4294901760
    %741 = vmatpush1.msra.mxu0 %v740
    %742 = vmatprep.subr.mxu0 0.0
    %v743 = vand.u32 %v90, 4294901760
    %744 = vmatpush1.msra.mxu0 %v743
    %745 = vmatprep.subr.mxu0 0.0
    %v746 = vand.u32 %v89, 4294901760
    %747 = vmatpush1.msra.mxu0 %v746
    %748 = vmatprep.subr.mxu0 0.0
    %v749 = vand.u32 %v88, 4294901760
    %750 = vmatpush1.msra.mxu0 %v749
    %751 = vmatprep.subr.mxu0 0.0
    %v752 = vand.u32 %v87, 4294901760
    %753 = vmatpush1.msra.mxu0 %v752
    %754 = vmatprep.subr.mxu0 0.0
    %v755 = vand.u32 %v86, 4294901760
    %756 = vmatpush1.msra.mxu0 %v755
    %757 = vmatprep.subr.mxu0 0.0
    %v758 = vand.u32 %v85, 4294901760
    %759 = vmatpush1.msra.mxu0 %v758
    %760 = vmatprep.subr.mxu0 0.0
    %v761 = vand.u32 %v84, 4294901760
    %762 = vmatpush1.msra.mxu0 %v761
    %763 = vmatprep.subr.mxu0 0.0
    %v764 = vand.u32 %v83, 4294901760
    %765 = vmatpush1.msra.mxu0 %v764
    %766 = vmatprep.subr.mxu0 0.0
    %v767 = vand.u32 %v82, 4294901760
    %768 = vmatpush1.msra.mxu0 %v767
    %769 = vmatprep.subr.mxu0 0.0
    %v770 = vand.u32 %v81, 4294901760
    %771 = vmatpush1.msra.mxu0 %v770
    %772 = vmatprep.subr.mxu0 0.0
    %v773 = vand.u32 %v80, 4294901760
    %774 = vmatpush1.msra.mxu0 %v773
    %775 = vmatprep.subr.mxu0 0.0
    %v776 = vand.u32 %v79, 4294901760
    %777 = vmatpush1.msra.mxu0 %v776
    %778 = vmatprep.subr.mxu0 0.0
    %v779 = vand.u32 %v78, 4294901760
    %780 = vmatpush1.msra.mxu0 %v779
    %781 = vmatprep.subr.mxu0 0.0
    %v782 = vand.u32 %v77, 4294901760
    %783 = vmatpush1.msra.mxu0 %v782
    %784 = vmatprep.subr.mxu0 0.0
    %785 = vmatpush2.msra.mxu0 0.0
    %786 = vmatprep.subr.mxu0 0.0
    %787 = vmatpush2.msra.mxu0 0.0
    %788 = vmatprep.subr.mxu0 0.0
    %789 = vmatpush2.msra.mxu0 0.0
    %790 = vmatprep.subr.mxu0 0.0
    %791 = vmatpush2.msra.mxu0 0.0
    %792 = vmatprep.subr.mxu0 0.0
    %793 = vmatpush2.msra.mxu0 0.0
    %794 = vmatprep.subr.mxu0 0.0
    %795 = vmatpush2.msra.mxu0 0.0
    %796 = vmatprep.subr.mxu0 0.0
    %797 = vmatpush2.msra.mxu0 0.0
    %798 = vmatprep.subr.mxu0 0.0
    %799 = vmatpush2.msra.mxu0 0.0
    %800 = vmatprep.subr.mxu0 0.0
    %801 = vmatpush2.msra.mxu0 0.0
    %802 = vmatprep.subr.mxu0 0.0
    %803 = vmatpush2.msra.mxu0 0.0
    %804 = vmatprep.subr.mxu0 0.0
    %805 = vmatpush2.msra.mxu0 0.0
    %806 = vmatprep.subr.mxu0 0.0
    %807 = vmatpush2.msra.mxu0 0.0
    %808 = vmatprep.subr.mxu0 0.0
    %809 = vmatpush2.msra.mxu0 0.0
    %810 = vmatprep.subr.mxu0 0.0
    %811 = vmatpush2.msra.mxu0 0.0
    %812 = vmatprep.subr.mxu0 0.0
    %813 = vmatpush2.msra.mxu0 0.0
    %814 = vmatprep.subr.mxu0 0.0
    %815 = vmatpush2.msra.mxu0 0.0
    %816 = vmatprep.mubr.f32.mxu0 0.0
    %v817 = vand.u32 %v735, 4294901760
    %v818 = vsub.f32 %v735, %v817
    %v819 = vand.u32 %v818, 4294901760
    %v820 = vsub.f32 %v818, %v819
    %v821 = vand.u32 %v820, 4294901760
    %822 = vmatmul.mubr.f32.gmra.mxu0 %v821
    %v823 = vpop.f32.mrf.mxu0
    %v824 = vadd.f32 0.0, %v823
    %v825 = vpop.f32.mrf.mxu0
    %826 = vdwg.mxu0
    %827 = vmatprep.subr.mxu0 0.0
    %v828 = vand.u32 %v92, 4294901760
    %v829 = vsub.f32 %v92, %v828
    %v830 = vand.u32 %v829, 4294901760
    %v831 = vsub.f32 %v829, %v830
    %v832 = vand.u32 %v831, 4294901760
    %833 = vmatpush1.msra.mxu0 %v832
    %834 = vmatprep.subr.mxu0 0.0
    %v835 = vand.u32 %v91, 4294901760
    %v836 = vsub.f32 %v91, %v835
    %v837 = vand.u32 %v836, 4294901760
    %v838 = vsub.f32 %v836, %v837
    %v839 = vand.u32 %v838, 4294901760
    %840 = vmatpush1.msra.mxu0 %v839
    %841 = vmatprep.subr.mxu0 0.0
    %v842 = vand.u32 %v90, 4294901760
    %v843 = vsub.f32 %v90, %v842
    %v844 = vand.u32 %v843, 4294901760
    %v845 = vsub.f32 %v843, %v844
    %v846 = vand.u32 %v845, 4294901760
    %847 = vmatpush1.msra.mxu0 %v846
    %848 = vmatprep.subr.mxu0 0.0
    %v849 = vand.u32 %v89, 4294901760
    %v850 = vsub.f32 %v89, %v849
    %v851 = vand.u32 %v850, 4294901760
    %v852 = vsub.f32 %v850, %v851
    %v853 = vand.u32 %v852, 4294901760
    %854 = vmatpush1.msra.mxu0 %v853
    %855 = vmatprep.subr.mxu0 0.0
    %v856 = vand.u32 %v88, 4294901760
    %v857 = vsub.f32 %v88, %v856
    %v858 = vand.u32 %v857, 4294901760
    %v859 = vsub.f32 %v857, %v858
    %v860 = vand.u32 %v859, 4294901760
    %861 = vmatpush1.msra.mxu0 %v860
    %862 = vmatprep.subr.mxu0 0.0
    %v863 = vand.u32 %v87, 4294901760
    %v864 = vsub.f32 %v87, %v863
    %v865 = vand.u32 %v864, 4294901760
    %v866 = vsub.f32 %v864, %v865
    %v867 = vand.u32 %v866, 4294901760
    %868 = vmatpush1.msra.mxu0 %v867
    %869 = vmatprep.subr.mxu0 0.0
    %v870 = vand.u32 %v86, 4294901760
    %v871 = vsub.f32 %v86, %v870
    %v872 = vand.u32 %v871, 4294901760
    %v873 = vsub.f32 %v871, %v872
    %v874 = vand.u32 %v873, 4294901760
    %875 = vmatpush1.msra.mxu0 %v874
    %876 = vmatprep.subr.mxu0 0.0
    %v877 = vand.u32 %v85, 4294901760
    %v878 = vsub.f32 %v85, %v877
    %v879 = vand.u32 %v878, 4294901760
    %v880 = vsub.f32 %v878, %v879
    %v881 = vand.u32 %v880, 4294901760
    %882 = vmatpush1.msra.mxu0 %v881
    %883 = vmatprep.subr.mxu0 0.0
    %v884 = vand.u32 %v84, 4294901760
    %v885 = vsub.f32 %v84, %v884
    %v886 = vand.u32 %v885, 4294901760
    %v887 = vsub.f32 %v885, %v886
    %v888 = vand.u32 %v887, 4294901760
    %889 = vmatpush1.msra.mxu0 %v888
    %890 = vmatprep.subr.mxu0 0.0
    %v891 = vand.u32 %v83, 4294901760
    %v892 = vsub.f32 %v83, %v891
    %v893 = vand.u32 %v892, 4294901760
    %v894 = vsub.f32 %v892, %v893
    %v895 = vand.u32 %v894, 4294901760
    %896 = vmatpush1.msra.mxu0 %v895
    %897 = vmatprep.subr.mxu0 0.0
    %v898 = vand.u32 %v82, 4294901760
    %v899 = vsub.f32 %v82, %v898
    %v900 = vand.u32 %v899, 4294901760
    %v901 = vsub.f32 %v899, %v900
    %v902 = vand.u32 %v901, 4294901760
    %903 = vmatpush1.msra.mxu0 %v902
    %904 = vmatprep.subr.mxu0 0.0
    %v905 = vand.u32 %v81, 4294901760
    %v906 = vsub.f32 %v81, %v905
    %v907 = vand.u32 %v906, 4294901760
    %v908 = vsub.f32 %v906, %v907
    %v909 = vand.u32 %v908, 4294901760
    %910 = vmatpush1.msra.mxu0 %v909
    %911 = vmatprep.subr.mxu0 0.0
    %v912 = vand.u32 %v80, 4294901760
    %v913 = vsub.f32 %v80, %v912
    %v914 = vand.u32 %v913, 4294901760
    %v915 = vsub.f32 %v913, %v914
    %v916 = vand.u32 %v915, 4294901760
    %917 = vmatpush1.msra.mxu0 %v916
    %918 = vmatprep.subr.mxu0 0.0
    %v919 = vand.u32 %v79, 4294901760
    %v920 = vsub.f32 %v79, %v919
    %v921 = vand.u32 %v920, 4294901760
    %v922 = vsub.f32 %v920, %v921
    %v923 = vand.u32 %v922, 4294901760
    %924 = vmatpush1.msra.mxu0 %v923
    %925 = vmatprep.subr.mxu0 0.0
    %v926 = vand.u32 %v78, 4294901760
    %v927 = vsub.f32 %v78, %v926
    %v928 = vand.u32 %v927, 4294901760
    %v929 = vsub.f32 %v927, %v928
    %v930 = vand.u32 %v929, 4294901760
    %931 = vmatpush1.msra.mxu0 %v930
    %932 = vmatprep.subr.mxu0 0.0
    %v933 = vand.u32 %v77, 4294901760
    %v934 = vsub.f32 %v77, %v933
    %v935 = vand.u32 %v934, 4294901760
    %v936 = vsub.f32 %v934, %v935
    %v937 = vand.u32 %v936, 4294901760
    %938 = vmatpush1.msra.mxu0 %v937
    %939 = vmatprep.subr.mxu0 0.0
    %940 = vmatpush2.msra.mxu0 0.0
    %941 = vmatprep.subr.mxu0 0.0
    %942 = vmatpush2.msra.mxu0 0.0
    %943 = vmatprep.subr.mxu0 0.0
    %944 = vmatpush2.msra.mxu0 0.0
    %945 = vmatprep.subr.mxu0 0.0
    %946 = vmatpush2.msra.mxu0 0.0
    %947 = vmatprep.subr.mxu0 0.0
    %948 = vmatpush2.msra.mxu0 0.0
    %949 = vmatprep.subr.mxu0 0.0
    %950 = vmatpush2.msra.mxu0 0.0
    %951 = vmatprep.subr.mxu0 0.0
    %952 = vmatpush2.msra.mxu0 0.0
    %953 = vmatprep.subr.mxu0 0.0
    %954 = vmatpush2.msra.mxu0 0.0
    %955 = vmatprep.subr.mxu0 0.0
    %956 = vmatpush2.msra.mxu0 0.0
    %957 = vmatprep.subr.mxu0 0.0
    %958 = vmatpush2.msra.mxu0 0.0
    %959 = vmatprep.subr.mxu0 0.0
    %960 = vmatpush2.msra.mxu0 0.0
    %961 = vmatprep.subr.mxu0 0.0
    %962 = vmatpush2.msra.mxu0 0.0
    %963 = vmatprep.subr.mxu0 0.0
    %964 = vmatpush2.msra.mxu0 0.0
    %965 = vmatprep.subr.mxu0 0.0
    %966 = vmatpush2.msra.mxu0 0.0
    %967 = vmatprep.subr.mxu0 0.0
    %968 = vmatpush2.msra.mxu0 0.0
    %969 = vmatprep.subr.mxu0 0.0
    %970 = vmatpush2.msra.mxu0 0.0
    %971 = vmatprep.mubr.f32.mxu0 0.0
    %v972 = vand.u32 %v735, 4294901760
    %973 = vmatmul.mubr.f32.gmra.mxu0 %v972
    %v974 = vpop.f32.mrf.mxu0
    %v975 = vadd.f32 %v824, %v974
    %v976 = vpop.f32.mrf.mxu0
    %977 = vdwg.mxu0
    %978 = vmatprep.subr.mxu0 0.0
    %v979 = vand.u32 %v92, 4294901760
    %v980 = vsub.f32 %v92, %v979
    %981 = vmatpush1.msra.mxu0 %v980
    %982 = vmatprep.subr.mxu0 0.0
    %v983 = vand.u32 %v91, 4294901760
    %v984 = vsub.f32 %v91, %v983
    %985 = vmatpush1.msra.mxu0 %v984
    %986 = vmatprep.subr.mxu0 0.0
    %v987 = vand.u32 %v90, 4294901760
    %v988 = vsub.f32 %v90, %v987
    %989 = vmatpush1.msra.mxu0 %v988
    %990 = vmatprep.subr.mxu0 0.0
    %v991 = vand.u32 %v89, 4294901760
    %v992 = vsub.f32 %v89, %v991
    %993 = vmatpush1.msra.mxu0 %v992
    %994 = vmatprep.subr.mxu0 0.0
    %v995 = vand.u32 %v88, 4294901760
    %v996 = vsub.f32 %v88, %v995
    %997 = vmatpush1.msra.mxu0 %v996
    %998 = vmatprep.subr.mxu0 0.0
    %v999 = vand.u32 %v87, 4294901760
    %v1000 = vsub.f32 %v87, %v999
    %1001 = vmatpush1.msra.mxu0 %v1000
    %1002 = vmatprep.subr.mxu0 0.0
    %v1003 = vand.u32 %v86, 4294901760
    %v1004 = vsub.f32 %v86, %v1003
    %1005 = vmatpush1.msra.mxu0 %v1004
    %1006 = vmatprep.subr.mxu0 0.0
    %v1007 = vand.u32 %v85, 4294901760
    %v1008 = vsub.f32 %v85, %v1007
    %1009 = vmatpush1.msra.mxu0 %v1008
    %1010 = vmatprep.subr.mxu0 0.0
    %v1011 = vand.u32 %v84, 4294901760
    %v1012 = vsub.f32 %v84, %v1011
    %1013 = vmatpush1.msra.mxu0 %v1012
    %1014 = vmatprep.subr.mxu0 0.0
    %v1015 = vand.u32 %v83, 4294901760
    %v1016 = vsub.f32 %v83, %v1015
    %1017 = vmatpush1.msra.mxu0 %v1016
    %1018 = vmatprep.subr.mxu0 0.0
    %v1019 = vand.u32 %v82, 4294901760
    %v1020 = vsub.f32 %v82, %v1019
    %1021 = vmatpush1.msra.mxu0 %v1020
    %1022 = vmatprep.subr.mxu0 0.0
    %v1023 = vand.u32 %v81, 4294901760
    %v1024 = vsub.f32 %v81, %v1023
    %1025 = vmatpush1.msra.mxu0 %v1024
    %1026 = vmatprep.subr.mxu0 0.0
    %v1027 = vand.u32 %v80, 4294901760
    %v1028 = vsub.f32 %v80, %v1027
    %1029 = vmatpush1.msra.mxu0 %v1028
    %1030 = vmatprep.subr.mxu0 0.0
    %v1031 = vand.u32 %v79, 4294901760
    %v1032 = vsub.f32 %v79, %v1031
    %1033 = vmatpush1.msra.mxu0 %v1032
    %1034 = vmatprep.subr.mxu0 0.0
    %v1035 = vand.u32 %v78, 4294901760
    %v1036 = vsub.f32 %v78, %v1035
    %1037 = vmatpush1.msra.mxu0 %v1036
    %1038 = vmatprep.subr.mxu0 0.0
    %v1039 = vand.u32 %v77, 4294901760
    %v1040 = vsub.f32 %v77, %v1039
    %1041 = vmatpush1.msra.mxu0 %v1040
    %1042 = vmatprep.subr.mxu0 0.0
    %1043 = vmatpush2.msra.mxu0 0.0
    %1044 = vmatprep.subr.mxu0 0.0
    %1045 = vmatpush2.msra.mxu0 0.0
    %1046 = vmatprep.subr.mxu0 0.0
    %1047 = vmatpush2.msra.mxu0 0.0
    %1048 = vmatprep.subr.mxu0 0.0
    %1049 = vmatpush2.msra.mxu0 0.0
    %1050 = vmatprep.subr.mxu0 0.0
    %1051 = vmatpush2.msra.mxu0 0.0
    %1052 = vmatprep.subr.mxu0 0.0
    %1053 = vmatpush2.msra.mxu0 0.0
    %1054 = vmatprep.subr.mxu0 0.0
    %1055 = vmatpush2.msra.mxu0 0.0
    %1056 = vmatprep.subr.mxu0 0.0
    %1057 = vmatpush2.msra.mxu0 0.0
    %1058 = vmatprep.subr.mxu0 0.0
    %1059 = vmatpush2.msra.mxu0 0.0
    %1060 = vmatprep.subr.mxu0 0.0
    %1061 = vmatpush2.msra.mxu0 0.0
    %1062 = vmatprep.subr.mxu0 0.0
    %1063 = vmatpush2.msra.mxu0 0.0
    %1064 = vmatprep.subr.mxu0 0.0
    %1065 = vmatpush2.msra.mxu0 0.0
    %1066 = vmatprep.subr.mxu0 0.0
    %1067 = vmatpush2.msra.mxu0 0.0
    %1068 = vmatprep.subr.mxu0 0.0
    %1069 = vmatpush2.msra.mxu0 0.0
    %1070 = vmatprep.subr.mxu0 0.0
    %1071 = vmatpush2.msra.mxu0 0.0
    %1072 = vmatprep.subr.mxu0 0.0
    %1073 = vmatpush2.msra.mxu0 0.0
    %1074 = vmatprep.mubr.f32.mxu0 0.0
    %v1075 = vand.u32 %v735, 4294901760
    %v1076 = vsub.f32 %v735, %v1075
    %1077 = vmatmul.mubr.f32.gmra.mxu0 %v1076
    %v1078 = vpop.f32.mrf.mxu0
    %v1079 = vadd.f32 %v975, %v1078
    %v1080 = vpop.f32.mrf.mxu0
    %1081 = vdwg.mxu0
    %1082 = vmatprep.subr.mxu0 0.0
    %v1083 = vand.u32 %v92, 4294901760
    %1084 = vmatpush1.msra.mxu0 %v1083
    %1085 = vmatprep.subr.mxu0 0.0
    %v1086 = vand.u32 %v91, 4294901760
    %1087 = vmatpush1.msra.mxu0 %v1086
    %1088 = vmatprep.subr.mxu0 0.0
    %v1089 = vand.u32 %v90, 4294901760
    %1090 = vmatpush1.msra.mxu0 %v1089
    %1091 = vmatprep.subr.mxu0 0.0
    %v1092 = vand.u32 %v89, 4294901760
    %1093 = vmatpush1.msra.mxu0 %v1092
    %1094 = vmatprep.subr.mxu0 0.0
    %v1095 = vand.u32 %v88, 4294901760
    %1096 = vmatpush1.msra.mxu0 %v1095
    %1097 = vmatprep.subr.mxu0 0.0
    %v1098 = vand.u32 %v87, 4294901760
    %1099 = vmatpush1.msra.mxu0 %v1098
    %1100 = vmatprep.subr.mxu0 0.0
    %v1101 = vand.u32 %v86, 4294901760
    %1102 = vmatpush1.msra.mxu0 %v1101
    %1103 = vmatprep.subr.mxu0 0.0
    %v1104 = vand.u32 %v85, 4294901760
    %1105 = vmatpush1.msra.mxu0 %v1104
    %1106 = vmatprep.subr.mxu0 0.0
    %v1107 = vand.u32 %v84, 4294901760
    %1108 = vmatpush1.msra.mxu0 %v1107
    %1109 = vmatprep.subr.mxu0 0.0
    %v1110 = vand.u32 %v83, 4294901760
    %1111 = vmatpush1.msra.mxu0 %v1110
    %1112 = vmatprep.subr.mxu0 0.0
    %v1113 = vand.u32 %v82, 4294901760
    %1114 = vmatpush1.msra.mxu0 %v1113
    %1115 = vmatprep.subr.mxu0 0.0
    %v1116 = vand.u32 %v81, 4294901760
    %1117 = vmatpush1.msra.mxu0 %v1116
    %1118 = vmatprep.subr.mxu0 0.0
    %v1119 = vand.u32 %v80, 4294901760
    %1120 = vmatpush1.msra.mxu0 %v1119
    %1121 = vmatprep.subr.mxu0 0.0
    %v1122 = vand.u32 %v79, 4294901760
    %1123 = vmatpush1.msra.mxu0 %v1122
    %1124 = vmatprep.subr.mxu0 0.0
    %v1125 = vand.u32 %v78, 4294901760
    %1126 = vmatpush1.msra.mxu0 %v1125
    %1127 = vmatprep.subr.mxu0 0.0
    %v1128 = vand.u32 %v77, 4294901760
    %1129 = vmatpush1.msra.mxu0 %v1128
    %1130 = vmatprep.subr.mxu0 0.0
    %1131 = vmatpush2.msra.mxu0 0.0
    %1132 = vmatprep.subr.mxu0 0.0
    %1133 = vmatpush2.msra.mxu0 0.0
    %1134 = vmatprep.subr.mxu0 0.0
    %1135 = vmatpush2.msra.mxu0 0.0
    %1136 = vmatprep.subr.mxu0 0.0
    %1137 = vmatpush2.msra.mxu0 0.0
    %1138 = vmatprep.subr.mxu0 0.0
    %1139 = vmatpush2.msra.mxu0 0.0
    %1140 = vmatprep.subr.mxu0 0.0
    %1141 = vmatpush2.msra.mxu0 0.0
    %1142 = vmatprep.subr.mxu0 0.0
    %1143 = vmatpush2.msra.mxu0 0.0
    %1144 = vmatprep.subr.mxu0 0.0
    %1145 = vmatpush2.msra.mxu0 0.0
    %1146 = vmatprep.subr.mxu0 0.0
    %1147 = vmatpush2.msra.mxu0 0.0
    %1148 = vmatprep.subr.mxu0 0.0
    %1149 = vmatpush2.msra.mxu0 0.0
    %1150 = vmatprep.subr.mxu0 0.0
    %1151 = vmatpush2.msra.mxu0 0.0
    %1152 = vmatprep.subr.mxu0 0.0
    %1153 = vmatpush2.msra.mxu0 0.0
    %1154 = vmatprep.subr.mxu0 0.0
    %1155 = vmatpush2.msra.mxu0 0.0
    %1156 = vmatprep.subr.mxu0 0.0
    %1157 = vmatpush2.msra.mxu0 0.0
    %1158 = vmatprep.subr.mxu0 0.0
    %1159 = vmatpush2.msra.mxu0 0.0
    %1160 = vmatprep.subr.mxu0 0.0
    %1161 = vmatpush2.msra.mxu0 0.0
    %1162 = vmatprep.mubr.f32.mxu0 0.0
    %v1163 = vand.u32 %v735, 4294901760
    %v1164 = vsub.f32 %v735, %v1163
    %v1165 = vand.u32 %v1164, 4294901760
    %1166 = vmatmul.mubr.f32.gmra.mxu0 %v1165
    %v1167 = vpop.f32.mrf.mxu0
    %v1168 = vadd.f32 %v1079, %v1167
    %v1169 = vpop.f32.mrf.mxu0
    %1170 = vdwg.mxu0
    %1171 = vmatprep.subr.mxu0 0.0
    %v1172 = vand.u32 %v92, 4294901760
    %v1173 = vsub.f32 %v92, %v1172
    %v1174 = vand.u32 %v1173, 4294901760
    %1175 = vmatpush1.msra.mxu0 %v1174
    %1176 = vmatprep.subr.mxu0 0.0
    %v1177 = vand.u32 %v91, 4294901760
    %v1178 = vsub.f32 %v91, %v1177
    %v1179 = vand.u32 %v1178, 4294901760
    %1180 = vmatpush1.msra.mxu0 %v1179
    %1181 = vmatprep.subr.mxu0 0.0
    %v1182 = vand.u32 %v90, 4294901760
    %v1183 = vsub.f32 %v90, %v1182
    %v1184 = vand.u32 %v1183, 4294901760
    %1185 = vmatpush1.msra.mxu0 %v1184
    %1186 = vmatprep.subr.mxu0 0.0
    %v1187 = vand.u32 %v89, 4294901760
    %v1188 = vsub.f32 %v89, %v1187
    %v1189 = vand.u32 %v1188, 4294901760
    %1190 = vmatpush1.msra.mxu0 %v1189
    %1191 = vmatprep.subr.mxu0 0.0
    %v1192 = vand.u32 %v88, 4294901760
    %v1193 = vsub.f32 %v88, %v1192
    %v1194 = vand.u32 %v1193, 4294901760
    %1195 = vmatpush1.msra.mxu0 %v1194
    %1196 = vmatprep.subr.mxu0 0.0
    %v1197 = vand.u32 %v87, 4294901760
    %v1198 = vsub.f32 %v87, %v1197
    %v1199 = vand.u32 %v1198, 4294901760
    %1200 = vmatpush1.msra.mxu0 %v1199
    %1201 = vmatprep.subr.mxu0 0.0
    %v1202 = vand.u32 %v86, 4294901760
    %v1203 = vsub.f32 %v86, %v1202
    %v1204 = vand.u32 %v1203, 4294901760
    %1205 = vmatpush1.msra.mxu0 %v1204
    %1206 = vmatprep.subr.mxu0 0.0
    %v1207 = vand.u32 %v85, 4294901760
    %v1208 = vsub.f32 %v85, %v1207
    %v1209 = vand.u32 %v1208, 4294901760
    %1210 = vmatpush1.msra.mxu0 %v1209
    %1211 = vmatprep.subr.mxu0 0.0
    %v1212 = vand.u32 %v84, 4294901760
    %v1213 = vsub.f32 %v84, %v1212
    %v1214 = vand.u32 %v1213, 4294901760
    %1215 = vmatpush1.msra.mxu0 %v1214
    %1216 = vmatprep.subr.mxu0 0.0
    %v1217 = vand.u32 %v83, 4294901760
    %v1218 = vsub.f32 %v83, %v1217
    %v1219 = vand.u32 %v1218, 4294901760
    %1220 = vmatpush1.msra.mxu0 %v1219
    %1221 = vmatprep.subr.mxu0 0.0
    %v1222 = vand.u32 %v82, 4294901760
    %v1223 = vsub.f32 %v82, %v1222
    %v1224 = vand.u32 %v1223, 4294901760
    %1225 = vmatpush1.msra.mxu0 %v1224
    %1226 = vmatprep.subr.mxu0 0.0
    %v1227 = vand.u32 %v81, 4294901760
    %v1228 = vsub.f32 %v81, %v1227
    %v1229 = vand.u32 %v1228, 4294901760
    %1230 = vmatpush1.msra.mxu0 %v1229
    %1231 = vmatprep.subr.mxu0 0.0
    %v1232 = vand.u32 %v80, 4294901760
    %v1233 = vsub.f32 %v80, %v1232
    %v1234 = vand.u32 %v1233, 4294901760
    %1235 = vmatpush1.msra.mxu0 %v1234
    %1236 = vmatprep.subr.mxu0 0.0
    %v1237 = vand.u32 %v79, 4294901760
    %v1238 = vsub.f32 %v79, %v1237
    %v1239 = vand.u32 %v1238, 4294901760
    %1240 = vmatpush1.msra.mxu0 %v1239
    %1241 = vmatprep.subr.mxu0 0.0
    %v1242 = vand.u32 %v78, 4294901760
    %v1243 = vsub.f32 %v78, %v1242
    %v1244 = vand.u32 %v1243, 4294901760
    %1245 = vmatpush1.msra.mxu0 %v1244
    %1246 = vmatprep.subr.mxu0 0.0
    %v1247 = vand.u32 %v77, 4294901760
    %v1248 = vsub.f32 %v77, %v1247
    %v1249 = vand.u32 %v1248, 4294901760
    %1250 = vmatpush1.msra.mxu0 %v1249
    %1251 = vmatprep.subr.mxu0 0.0
    %1252 = vmatpush2.msra.mxu0 0.0
    %1253 = vmatprep.subr.mxu0 0.0
    %1254 = vmatpush2.msra.mxu0 0.0
    %1255 = vmatprep.subr.mxu0 0.0
    %1256 = vmatpush2.msra.mxu0 0.0
    %1257 = vmatprep.subr.mxu0 0.0
    %1258 = vmatpush2.msra.mxu0 0.0
    %1259 = vmatprep.subr.mxu0 0.0
    %1260 = vmatpush2.msra.mxu0 0.0
    %1261 = vmatprep.subr.mxu0 0.0
    %1262 = vmatpush2.msra.mxu0 0.0
    %1263 = vmatprep.subr.mxu0 0.0
    %1264 = vmatpush2.msra.mxu0 0.0
    %1265 = vmatprep.subr.mxu0 0.0
    %1266 = vmatpush2.msra.mxu0 0.0
    %1267 = vmatprep.subr.mxu0 0.0
    %1268 = vmatpush2.msra.mxu0 0.0
    %1269 = vmatprep.subr.mxu0 0.0
    %1270 = vmatpush2.msra.mxu0 0.0
    %1271 = vmatprep.subr.mxu0 0.0
    %1272 = vmatpush2.msra.mxu0 0.0
    %1273 = vmatprep.subr.mxu0 0.0
    %1274 = vmatpush2.msra.mxu0 0.0
    %1275 = vmatprep.subr.mxu0 0.0
    %1276 = vmatpush2.msra.mxu0 0.0
    %1277 = vmatprep.subr.mxu0 0.0
    %1278 = vmatpush2.msra.mxu0 0.0
    %1279 = vmatprep.subr.mxu0 0.0
    %1280 = vmatpush2.msra.mxu0 0.0
    %1281 = vmatprep.subr.mxu0 0.0
    %1282 = vmatpush2.msra.mxu0 0.0
    %1283 = vmatprep.mubr.f32.mxu0 0.0
    %v1284 = vand.u32 %v735, 4294901760
    %1285 = vmatmul.mubr.f32.gmra.mxu0 %v1284
    %v1286 = vpop.f32.mrf.mxu0
    %v1287 = vadd.f32 %v1168, %v1286
    %v1288 = vpop.f32.mrf.mxu0
    %1289 = vdwg.mxu0
    %1290 = vmatprep.subr.mxu0 0.0
    %v1291 = vand.u32 %v92, 4294901760
    %1292 = vmatpush1.msra.mxu0 %v1291
    %1293 = vmatprep.subr.mxu0 0.0
    %v1294 = vand.u32 %v91, 4294901760
    %1295 = vmatpush1.msra.mxu0 %v1294
    %1296 = vmatprep.subr.mxu0 0.0
    %v1297 = vand.u32 %v90, 4294901760
    %1298 = vmatpush1.msra.mxu0 %v1297
    %1299 = vmatprep.subr.mxu0 0.0
    %v1300 = vand.u32 %v89, 4294901760
    %1301 = vmatpush1.msra.mxu0 %v1300
    %1302 = vmatprep.subr.mxu0 0.0
    %v1303 = vand.u32 %v88, 4294901760
    %1304 = vmatpush1.msra.mxu0 %v1303
    %1305 = vmatprep.subr.mxu0 0.0
    %v1306 = vand.u32 %v87, 4294901760
    %1307 = vmatpush1.msra.mxu0 %v1306
    %1308 = vmatprep.subr.mxu0 0.0
    %v1309 = vand.u32 %v86, 4294901760
    %1310 = vmatpush1.msra.mxu0 %v1309
    %1311 = vmatprep.subr.mxu0 0.0
    %v1312 = vand.u32 %v85, 4294901760
    %1313 = vmatpush1.msra.mxu0 %v1312
    %1314 = vmatprep.subr.mxu0 0.0
    %v1315 = vand.u32 %v84, 4294901760
    %1316 = vmatpush1.msra.mxu0 %v1315
    %1317 = vmatprep.subr.mxu0 0.0
    %v1318 = vand.u32 %v83, 4294901760
    %1319 = vmatpush1.msra.mxu0 %v1318
    %1320 = vmatprep.subr.mxu0 0.0
    %v1321 = vand.u32 %v82, 4294901760
    %1322 = vmatpush1.msra.mxu0 %v1321
    %1323 = vmatprep.subr.mxu0 0.0
    %v1324 = vand.u32 %v81, 4294901760
    %1325 = vmatpush1.msra.mxu0 %v1324
    %1326 = vmatprep.subr.mxu0 0.0
    %v1327 = vand.u32 %v80, 4294901760
    %1328 = vmatpush1.msra.mxu0 %v1327
    %1329 = vmatprep.subr.mxu0 0.0
    %v1330 = vand.u32 %v79, 4294901760
    %1331 = vmatpush1.msra.mxu0 %v1330
    %1332 = vmatprep.subr.mxu0 0.0
    %v1333 = vand.u32 %v78, 4294901760
    %1334 = vmatpush1.msra.mxu0 %v1333
    %1335 = vmatprep.subr.mxu0 0.0
    %v1336 = vand.u32 %v77, 4294901760
    %1337 = vmatpush1.msra.mxu0 %v1336
    %1338 = vmatprep.subr.mxu0 0.0
    %1339 = vmatpush2.msra.mxu0 0.0
    %1340 = vmatprep.subr.mxu0 0.0
    %1341 = vmatpush2.msra.mxu0 0.0
    %1342 = vmatprep.subr.mxu0 0.0
    %1343 = vmatpush2.msra.mxu0 0.0
    %1344 = vmatprep.subr.mxu0 0.0
    %1345 = vmatpush2.msra.mxu0 0.0
    %1346 = vmatprep.subr.mxu0 0.0
    %1347 = vmatpush2.msra.mxu0 0.0
    %1348 = vmatprep.subr.mxu0 0.0
    %1349 = vmatpush2.msra.mxu0 0.0
    %1350 = vmatprep.subr.mxu0 0.0
    %1351 = vmatpush2.msra.mxu0 0.0
    %1352 = vmatprep.subr.mxu0 0.0
    %1353 = vmatpush2.msra.mxu0 0.0
    %1354 = vmatprep.subr.mxu0 0.0
    %1355 = vmatpush2.msra.mxu0 0.0
    %1356 = vmatprep.subr.mxu0 0.0
    %1357 = vmatpush2.msra.mxu0 0.0
    %1358 = vmatprep.subr.mxu0 0.0
    %1359 = vmatpush2.msra.mxu0 0.0
    %1360 = vmatprep.subr.mxu0 0.0
    %1361 = vmatpush2.msra.mxu0 0.0
    %1362 = vmatprep.subr.mxu0 0.0
    %1363 = vmatpush2.msra.mxu0 0.0
    %1364 = vmatprep.subr.mxu0 0.0
    %1365 = vmatpush2.msra.mxu0 0.0
    %1366 = vmatprep.subr.mxu0 0.0
    %1367 = vmatpush2.msra.mxu0 0.0
    %1368 = vmatprep.subr.mxu0 0.0
    %1369 = vmatpush2.msra.mxu0 0.0
    %1370 = vmatprep.mubr.f32.mxu0 0.0
    %v1371 = vand.u32 %v735, 4294901760
    %1372 = vmatmul.mubr.f32.gmra.mxu0 %v1371
    %v1373 = vpop.f32.mrf.mxu0
    %v1374 = vadd.f32 %v1287, %v1373
    %v1375 = vpop.f32.mrf.mxu0
    %1376 = vdwg.mxu0
    %v1377 = vmul.f32 %v76, %v76
    %1378 = vmatprep.subr.mxu0 0.0
    %v1379 = vand.u32 %v92, 4294901760
    %1380 = vmatpush1.msra.mxu0 %v1379
    %1381 = vmatprep.subr.mxu0 0.0
    %v1382 = vand.u32 %v91, 4294901760
    %1383 = vmatpush1.msra.mxu0 %v1382
    %1384 = vmatprep.subr.mxu0 0.0
    %v1385 = vand.u32 %v90, 4294901760
    %1386 = vmatpush1.msra.mxu0 %v1385
    %1387 = vmatprep.subr.mxu0 0.0
    %v1388 = vand.u32 %v89, 4294901760
    %1389 = vmatpush1.msra.mxu0 %v1388
    %1390 = vmatprep.subr.mxu0 0.0
    %v1391 = vand.u32 %v88, 4294901760
    %1392 = vmatpush1.msra.mxu0 %v1391
    %1393 = vmatprep.subr.mxu0 0.0
    %v1394 = vand.u32 %v87, 4294901760
    %1395 = vmatpush1.msra.mxu0 %v1394
    %1396 = vmatprep.subr.mxu0 0.0
    %v1397 = vand.u32 %v86, 4294901760
    %1398 = vmatpush1.msra.mxu0 %v1397
    %1399 = vmatprep.subr.mxu0 0.0
    %v1400 = vand.u32 %v85, 4294901760
    %1401 = vmatpush1.msra.mxu0 %v1400
    %1402 = vmatprep.subr.mxu0 0.0
    %v1403 = vand.u32 %v84, 4294901760
    %1404 = vmatpush1.msra.mxu0 %v1403
    %1405 = vmatprep.subr.mxu0 0.0
    %v1406 = vand.u32 %v83, 4294901760
    %1407 = vmatpush1.msra.mxu0 %v1406
    %1408 = vmatprep.subr.mxu0 0.0
    %v1409 = vand.u32 %v82, 4294901760
    %1410 = vmatpush1.msra.mxu0 %v1409
    %1411 = vmatprep.subr.mxu0 0.0
    %v1412 = vand.u32 %v81, 4294901760
    %1413 = vmatpush1.msra.mxu0 %v1412
    %1414 = vmatprep.subr.mxu0 0.0
    %v1415 = vand.u32 %v80, 4294901760
    %1416 = vmatpush1.msra.mxu0 %v1415
    %1417 = vmatprep.subr.mxu0 0.0
    %v1418 = vand.u32 %v79, 4294901760
    %1419 = vmatpush1.msra.mxu0 %v1418
    %1420 = vmatprep.subr.mxu0 0.0
    %v1421 = vand.u32 %v78, 4294901760
    %1422 = vmatpush1.msra.mxu0 %v1421
    %1423 = vmatprep.subr.mxu0 0.0
    %v1424 = vand.u32 %v77, 4294901760
    %1425 = vmatpush1.msra.mxu0 %v1424
    %1426 = vmatprep.subr.mxu0 0.0
    %1427 = vmatpush2.msra.mxu0 0.0
    %1428 = vmatprep.subr.mxu0 0.0
    %1429 = vmatpush2.msra.mxu0 0.0
    %1430 = vmatprep.subr.mxu0 0.0
    %1431 = vmatpush2.msra.mxu0 0.0
    %1432 = vmatprep.subr.mxu0 0.0
    %1433 = vmatpush2.msra.mxu0 0.0
    %1434 = vmatprep.subr.mxu0 0.0
    %1435 = vmatpush2.msra.mxu0 0.0
    %1436 = vmatprep.subr.mxu0 0.0
    %1437 = vmatpush2.msra.mxu0 0.0
    %1438 = vmatprep.subr.mxu0 0.0
    %1439 = vmatpush2.msra.mxu0 0.0
    %1440 = vmatprep.subr.mxu0 0.0
    %1441 = vmatpush2.msra.mxu0 0.0
    %1442 = vmatprep.subr.mxu0 0.0
    %1443 = vmatpush2.msra.mxu0 0.0
    %1444 = vmatprep.subr.mxu0 0.0
    %1445 = vmatpush2.msra.mxu0 0.0
    %1446 = vmatprep.subr.mxu0 0.0
    %1447 = vmatpush2.msra.mxu0 0.0
    %1448 = vmatprep.subr.mxu0 0.0
    %1449 = vmatpush2.msra.mxu0 0.0
    %1450 = vmatprep.subr.mxu0 0.0
    %1451 = vmatpush2.msra.mxu0 0.0
    %1452 = vmatprep.subr.mxu0 0.0
    %1453 = vmatpush2.msra.mxu0 0.0
    %1454 = vmatprep.subr.mxu0 0.0
    %1455 = vmatpush2.msra.mxu0 0.0
    %1456 = vmatprep.subr.mxu0 0.0
    %1457 = vmatpush2.msra.mxu0 0.0
    %1458 = vmatprep.mubr.f32.mxu0 0.0
    %v1459 = vand.u32 %v1377, 4294901760
    %v1460 = vsub.f32 %v1377, %v1459
    %v1461 = vand.u32 %v1460, 4294901760
    %v1462 = vsub.f32 %v1460, %v1461
    %v1463 = vand.u32 %v1462, 4294901760
    %1464 = vmatmul.mubr.f32.gmra.mxu0 %v1463
    %v1465 = vpop.f32.mrf.mxu0
    %v1466 = vadd.f32 0.0, %v1465
    %v1467 = vpop.f32.mrf.mxu0
    %1468 = vdwg.mxu0
    %1469 = vmatprep.subr.mxu0 0.0
    %v1470 = vand.u32 %v92, 4294901760
    %v1471 = vsub.f32 %v92, %v1470
    %v1472 = vand.u32 %v1471, 4294901760
    %v1473 = vsub.f32 %v1471, %v1472
    %v1474 = vand.u32 %v1473, 4294901760
    %1475 = vmatpush1.msra.mxu0 %v1474
    %1476 = vmatprep.subr.mxu0 0.0
    %v1477 = vand.u32 %v91, 4294901760
    %v1478 = vsub.f32 %v91, %v1477
    %v1479 = vand.u32 %v1478, 4294901760
    %v1480 = vsub.f32 %v1478, %v1479
    %v1481 = vand.u32 %v1480, 4294901760
    %1482 = vmatpush1.msra.mxu0 %v1481
    %1483 = vmatprep.subr.mxu0 0.0
    %v1484 = vand.u32 %v90, 4294901760
    %v1485 = vsub.f32 %v90, %v1484
    %v1486 = vand.u32 %v1485, 4294901760
    %v1487 = vsub.f32 %v1485, %v1486
    %v1488 = vand.u32 %v1487, 4294901760
    %1489 = vmatpush1.msra.mxu0 %v1488
    %1490 = vmatprep.subr.mxu0 0.0
    %v1491 = vand.u32 %v89, 4294901760
    %v1492 = vsub.f32 %v89, %v1491
    %v1493 = vand.u32 %v1492, 4294901760
    %v1494 = vsub.f32 %v1492, %v1493
    %v1495 = vand.u32 %v1494, 4294901760
    %1496 = vmatpush1.msra.mxu0 %v1495
    %1497 = vmatprep.subr.mxu0 0.0
    %v1498 = vand.u32 %v88, 4294901760
    %v1499 = vsub.f32 %v88, %v1498
    %v1500 = vand.u32 %v1499, 4294901760
    %v1501 = vsub.f32 %v1499, %v1500
    %v1502 = vand.u32 %v1501, 4294901760
    %1503 = vmatpush1.msra.mxu0 %v1502
    %1504 = vmatprep.subr.mxu0 0.0
    %v1505 = vand.u32 %v87, 4294901760
    %v1506 = vsub.f32 %v87, %v1505
    %v1507 = vand.u32 %v1506, 4294901760
    %v1508 = vsub.f32 %v1506, %v1507
    %v1509 = vand.u32 %v1508, 4294901760
    %1510 = vmatpush1.msra.mxu0 %v1509
    %1511 = vmatprep.subr.mxu0 0.0
    %v1512 = vand.u32 %v86, 4294901760
    %v1513 = vsub.f32 %v86, %v1512
    %v1514 = vand.u32 %v1513, 4294901760
    %v1515 = vsub.f32 %v1513, %v1514
    %v1516 = vand.u32 %v1515, 4294901760
    %1517 = vmatpush1.msra.mxu0 %v1516
    %1518 = vmatprep.subr.mxu0 0.0
    %v1519 = vand.u32 %v85, 4294901760
    %v1520 = vsub.f32 %v85, %v1519
    %v1521 = vand.u32 %v1520, 4294901760
    %v1522 = vsub.f32 %v1520, %v1521
    %v1523 = vand.u32 %v1522, 4294901760
    %1524 = vmatpush1.msra.mxu0 %v1523
    %1525 = vmatprep.subr.mxu0 0.0
    %v1526 = vand.u32 %v84, 4294901760
    %v1527 = vsub.f32 %v84, %v1526
    %v1528 = vand.u32 %v1527, 4294901760
    %v1529 = vsub.f32 %v1527, %v1528
    %v1530 = vand.u32 %v1529, 4294901760
    %1531 = vmatpush1.msra.mxu0 %v1530
    %1532 = vmatprep.subr.mxu0 0.0
    %v1533 = vand.u32 %v83, 4294901760
    %v1534 = vsub.f32 %v83, %v1533
    %v1535 = vand.u32 %v1534, 4294901760
    %v1536 = vsub.f32 %v1534, %v1535
    %v1537 = vand.u32 %v1536, 4294901760
    %1538 = vmatpush1.msra.mxu0 %v1537
    %1539 = vmatprep.subr.mxu0 0.0
    %v1540 = vand.u32 %v82, 4294901760
    %v1541 = vsub.f32 %v82, %v1540
    %v1542 = vand.u32 %v1541, 4294901760
    %v1543 = vsub.f32 %v1541, %v1542
    %v1544 = vand.u32 %v1543, 4294901760
    %1545 = vmatpush1.msra.mxu0 %v1544
    %1546 = vmatprep.subr.mxu0 0.0
    %v1547 = vand.u32 %v81, 4294901760
    %v1548 = vsub.f32 %v81, %v1547
    %v1549 = vand.u32 %v1548, 4294901760
    %v1550 = vsub.f32 %v1548, %v1549
    %v1551 = vand.u32 %v1550, 4294901760
    %1552 = vmatpush1.msra.mxu0 %v1551
    %1553 = vmatprep.subr.mxu0 0.0
    %v1554 = vand.u32 %v80, 4294901760
    %v1555 = vsub.f32 %v80, %v1554
    %v1556 = vand.u32 %v1555, 4294901760
    %v1557 = vsub.f32 %v1555, %v1556
    %v1558 = vand.u32 %v1557, 4294901760
    %1559 = vmatpush1.msra.mxu0 %v1558
    %1560 = vmatprep.subr.mxu0 0.0
    %v1561 = vand.u32 %v79, 4294901760
    %v1562 = vsub.f32 %v79, %v1561
    %v1563 = vand.u32 %v1562, 4294901760
    %v1564 = vsub.f32 %v1562, %v1563
    %v1565 = vand.u32 %v1564, 4294901760
    %1566 = vmatpush1.msra.mxu0 %v1565
    %1567 = vmatprep.subr.mxu0 0.0
    %v1568 = vand.u32 %v78, 4294901760
    %v1569 = vsub.f32 %v78, %v1568
    %v1570 = vand.u32 %v1569, 4294901760
    %v1571 = vsub.f32 %v1569, %v1570
    %v1572 = vand.u32 %v1571, 4294901760
    %1573 = vmatpush1.msra.mxu0 %v1572
    %1574 = vmatprep.subr.mxu0 0.0
    %v1575 = vand.u32 %v77, 4294901760
    %v1576 = vsub.f32 %v77, %v1575
    %v1577 = vand.u32 %v1576, 4294901760
    %v1578 = vsub.f32 %v1576, %v1577
    %v1579 = vand.u32 %v1578, 4294901760
    %1580 = vmatpush1.msra.mxu0 %v1579
    %1581 = vmatprep.subr.mxu0 0.0
    %1582 = vmatpush2.msra.mxu0 0.0
    %1583 = vmatprep.subr.mxu0 0.0
    %1584 = vmatpush2.msra.mxu0 0.0
    %1585 = vmatprep.subr.mxu0 0.0
    %1586 = vmatpush2.msra.mxu0 0.0
    %1587 = vmatprep.subr.mxu0 0.0
    %1588 = vmatpush2.msra.mxu0 0.0
    %1589 = vmatprep.subr.mxu0 0.0
    %1590 = vmatpush2.msra.mxu0 0.0
    %1591 = vmatprep.subr.mxu0 0.0
    %1592 = vmatpush2.msra.mxu0 0.0
    %1593 = vmatprep.subr.mxu0 0.0
    %1594 = vmatpush2.msra.mxu0 0.0
    %1595 = vmatprep.subr.mxu0 0.0
    %1596 = vmatpush2.msra.mxu0 0.0
    %1597 = vmatprep.subr.mxu0 0.0
    %1598 = vmatpush2.msra.mxu0 0.0
    %1599 = vmatprep.subr.mxu0 0.0
    %1600 = vmatpush2.msra.mxu0 0.0
    %1601 = vmatprep.subr.mxu0 0.0
    %1602 = vmatpush2.msra.mxu0 0.0
    %1603 = vmatprep.subr.mxu0 0.0
    %1604 = vmatpush2.msra.mxu0 0.0
    %1605 = vmatprep.subr.mxu0 0.0
    %1606 = vmatpush2.msra.mxu0 0.0
    %1607 = vmatprep.subr.mxu0 0.0
    %1608 = vmatpush2.msra.mxu0 0.0
    %1609 = vmatprep.subr.mxu0 0.0
    %1610 = vmatpush2.msra.mxu0 0.0
    %1611 = vmatprep.subr.mxu0 0.0
    %1612 = vmatpush2.msra.mxu0 0.0
    %1613 = vmatprep.mubr.f32.mxu0 0.0
    %v1614 = vand.u32 %v1377, 4294901760
    %1615 = vmatmul.mubr.f32.gmra.mxu0 %v1614
    %v1616 = vpop.f32.mrf.mxu0
    %v1617 = vadd.f32 %v1466, %v1616
    %v1618 = vpop.f32.mrf.mxu0
    %1619 = vdwg.mxu0
    %1620 = vmatprep.subr.mxu0 0.0
    %v1621 = vand.u32 %v92, 4294901760
    %v1622 = vsub.f32 %v92, %v1621
    %1623 = vmatpush1.msra.mxu0 %v1622
    %1624 = vmatprep.subr.mxu0 0.0
    %v1625 = vand.u32 %v91, 4294901760
    %v1626 = vsub.f32 %v91, %v1625
    %1627 = vmatpush1.msra.mxu0 %v1626
    %1628 = vmatprep.subr.mxu0 0.0
    %v1629 = vand.u32 %v90, 4294901760
    %v1630 = vsub.f32 %v90, %v1629
    %1631 = vmatpush1.msra.mxu0 %v1630
    %1632 = vmatprep.subr.mxu0 0.0
    %v1633 = vand.u32 %v89, 4294901760
    %v1634 = vsub.f32 %v89, %v1633
    %1635 = vmatpush1.msra.mxu0 %v1634
    %1636 = vmatprep.subr.mxu0 0.0
    %v1637 = vand.u32 %v88, 4294901760
    %v1638 = vsub.f32 %v88, %v1637
    %1639 = vmatpush1.msra.mxu0 %v1638
    %1640 = vmatprep.subr.mxu0 0.0
    %v1641 = vand.u32 %v87, 4294901760
    %v1642 = vsub.f32 %v87, %v1641
    %1643 = vmatpush1.msra.mxu0 %v1642
    %1644 = vmatprep.subr.mxu0 0.0
    %v1645 = vand.u32 %v86, 4294901760
    %v1646 = vsub.f32 %v86, %v1645
    %1647 = vmatpush1.msra.mxu0 %v1646
    %1648 = vmatprep.subr.mxu0 0.0
    %v1649 = vand.u32 %v85, 4294901760
    %v1650 = vsub.f32 %v85, %v1649
    %1651 = vmatpush1.msra.mxu0 %v1650
    %1652 = vmatprep.subr.mxu0 0.0
    %v1653 = vand.u32 %v84, 4294901760
    %v1654 = vsub.f32 %v84, %v1653
    %1655 = vmatpush1.msra.mxu0 %v1654
    %1656 = vmatprep.subr.mxu0 0.0
    %v1657 = vand.u32 %v83, 4294901760
    %v1658 = vsub.f32 %v83, %v1657
    %1659 = vmatpush1.msra.mxu0 %v1658
    %1660 = vmatprep.subr.mxu0 0.0
    %v1661 = vand.u32 %v82, 4294901760
    %v1662 = vsub.f32 %v82, %v1661
    %1663 = vmatpush1.msra.mxu0 %v1662
    %1664 = vmatprep.subr.mxu0 0.0
    %v1665 = vand.u32 %v81, 4294901760
    %v1666 = vsub.f32 %v81, %v1665
    %1667 = vmatpush1.msra.mxu0 %v1666
    %1668 = vmatprep.subr.mxu0 0.0
    %v1669 = vand.u32 %v80, 4294901760
    %v1670 = vsub.f32 %v80, %v1669
    %1671 = vmatpush1.msra.mxu0 %v1670
    %1672 = vmatprep.subr.mxu0 0.0
    %v1673 = vand.u32 %v79, 4294901760
    %v1674 = vsub.f32 %v79, %v1673
    %1675 = vmatpush1.msra.mxu0 %v1674
    %1676 = vmatprep.subr.mxu0 0.0
    %v1677 = vand.u32 %v78, 4294901760
    %v1678 = vsub.f32 %v78, %v1677
    %1679 = vmatpush1.msra.mxu0 %v1678
    %1680 = vmatprep.subr.mxu0 0.0
    %v1681 = vand.u32 %v77, 4294901760
    %v1682 = vsub.f32 %v77, %v1681
    %1683 = vmatpush1.msra.mxu0 %v1682
    %1684 = vmatprep.subr.mxu0 0.0
    %1685 = vmatpush2.msra.mxu0 0.0
    %1686 = vmatprep.subr.mxu0 0.0
    %1687 = vmatpush2.msra.mxu0 0.0
    %1688 = vmatprep.subr.mxu0 0.0
    %1689 = vmatpush2.msra.mxu0 0.0
    %1690 = vmatprep.subr.mxu0 0.0
    %1691 = vmatpush2.msra.mxu0 0.0
    %1692 = vmatprep.subr.mxu0 0.0
    %1693 = vmatpush2.msra.mxu0 0.0
    %1694 = vmatprep.subr.mxu0 0.0
    %1695 = vmatpush2.msra.mxu0 0.0
    %1696 = vmatprep.subr.mxu0 0.0
    %1697 = vmatpush2.msra.mxu0 0.0
    %1698 = vmatprep.subr.mxu0 0.0
    %1699 = vmatpush2.msra.mxu0 0.0
    %1700 = vmatprep.subr.mxu0 0.0
    %1701 = vmatpush2.msra.mxu0 0.0
    %1702 = vmatprep.subr.mxu0 0.0
    %1703 = vmatpush2.msra.mxu0 0.0
    %1704 = vmatprep.subr.mxu0 0.0
    %1705 = vmatpush2.msra.mxu0 0.0
    %1706 = vmatprep.subr.mxu0 0.0
    %1707 = vmatpush2.msra.mxu0 0.0
    %1708 = vmatprep.subr.mxu0 0.0
    %1709 = vmatpush2.msra.mxu0 0.0
    %1710 = vmatprep.subr.mxu0 0.0
    %1711 = vmatpush2.msra.mxu0 0.0
    %1712 = vmatprep.subr.mxu0 0.0
    %1713 = vmatpush2.msra.mxu0 0.0
    %1714 = vmatprep.subr.mxu0 0.0
    %1715 = vmatpush2.msra.mxu0 0.0
    %1716 = vmatprep.mubr.f32.mxu0 0.0
    %v1717 = vand.u32 %v1377, 4294901760
    %v1718 = vsub.f32 %v1377, %v1717
    %1719 = vmatmul.mubr.f32.gmra.mxu0 %v1718
    %v1720 = vpop.f32.mrf.mxu0
    %v1721 = vadd.f32 %v1617, %v1720
    %v1722 = vpop.f32.mrf.mxu0
    %1723 = vdwg.mxu0
    %1724 = vmatprep.subr.mxu0 0.0
    %v1725 = vand.u32 %v92, 4294901760
    %1726 = vmatpush1.msra.mxu0 %v1725
    %1727 = vmatprep.subr.mxu0 0.0
    %v1728 = vand.u32 %v91, 4294901760
    %1729 = vmatpush1.msra.mxu0 %v1728
    %1730 = vmatprep.subr.mxu0 0.0
    %v1731 = vand.u32 %v90, 4294901760
    %1732 = vmatpush1.msra.mxu0 %v1731
    %1733 = vmatprep.subr.mxu0 0.0
    %v1734 = vand.u32 %v89, 4294901760
    %1735 = vmatpush1.msra.mxu0 %v1734
    %1736 = vmatprep.subr.mxu0 0.0
    %v1737 = vand.u32 %v88, 4294901760
    %1738 = vmatpush1.msra.mxu0 %v1737
    %1739 = vmatprep.subr.mxu0 0.0
    %v1740 = vand.u32 %v87, 4294901760
    %1741 = vmatpush1.msra.mxu0 %v1740
    %1742 = vmatprep.subr.mxu0 0.0
    %v1743 = vand.u32 %v86, 4294901760
    %1744 = vmatpush1.msra.mxu0 %v1743
    %1745 = vmatprep.subr.mxu0 0.0
    %v1746 = vand.u32 %v85, 4294901760
    %1747 = vmatpush1.msra.mxu0 %v1746
    %1748 = vmatprep.subr.mxu0 0.0
    %v1749 = vand.u32 %v84, 4294901760
    %1750 = vmatpush1.msra.mxu0 %v1749
    %1751 = vmatprep.subr.mxu0 0.0
    %v1752 = vand.u32 %v83, 4294901760
    %1753 = vmatpush1.msra.mxu0 %v1752
    %1754 = vmatprep.subr.mxu0 0.0
    %v1755 = vand.u32 %v82, 4294901760
    %1756 = vmatpush1.msra.mxu0 %v1755
    %1757 = vmatprep.subr.mxu0 0.0
    %v1758 = vand.u32 %v81, 4294901760
    %1759 = vmatpush1.msra.mxu0 %v1758
    %1760 = vmatprep.subr.mxu0 0.0
    %v1761 = vand.u32 %v80, 4294901760
    %1762 = vmatpush1.msra.mxu0 %v1761
    %1763 = vmatprep.subr.mxu0 0.0
    %v1764 = vand.u32 %v79, 4294901760
    %1765 = vmatpush1.msra.mxu0 %v1764
    %1766 = vmatprep.subr.mxu0 0.0
    %v1767 = vand.u32 %v78, 4294901760
    %1768 = vmatpush1.msra.mxu0 %v1767
    %1769 = vmatprep.subr.mxu0 0.0
    %v1770 = vand.u32 %v77, 4294901760
    %1771 = vmatpush1.msra.mxu0 %v1770
    %1772 = vmatprep.subr.mxu0 0.0
    %1773 = vmatpush2.msra.mxu0 0.0
    %1774 = vmatprep.subr.mxu0 0.0
    %1775 = vmatpush2.msra.mxu0 0.0
    %1776 = vmatprep.subr.mxu0 0.0
    %1777 = vmatpush2.msra.mxu0 0.0
    %1778 = vmatprep.subr.mxu0 0.0
    %1779 = vmatpush2.msra.mxu0 0.0
    %1780 = vmatprep.subr.mxu0 0.0
    %1781 = vmatpush2.msra.mxu0 0.0
    %1782 = vmatprep.subr.mxu0 0.0
    %1783 = vmatpush2.msra.mxu0 0.0
    %1784 = vmatprep.subr.mxu0 0.0
    %1785 = vmatpush2.msra.mxu0 0.0
    %1786 = vmatprep.subr.mxu0 0.0
    %1787 = vmatpush2.msra.mxu0 0.0
    %1788 = vmatprep.subr.mxu0 0.0
    %1789 = vmatpush2.msra.mxu0 0.0
    %1790 = vmatprep.subr.mxu0 0.0
    %1791 = vmatpush2.msra.mxu0 0.0
    %1792 = vmatprep.subr.mxu0 0.0
    %1793 = vmatpush2.msra.mxu0 0.0
    %1794 = vmatprep.subr.mxu0 0.0
    %1795 = vmatpush2.msra.mxu0 0.0
    %1796 = vmatprep.subr.mxu0 0.0
    %1797 = vmatpush2.msra.mxu0 0.0
    %1798 = vmatprep.subr.mxu0 0.0
    %1799 = vmatpush2.msra.mxu0 0.0
    %1800 = vmatprep.subr.mxu0 0.0
    %1801 = vmatpush2.msra.mxu0 0.0
    %1802 = vmatprep.subr.mxu0 0.0
    %1803 = vmatpush2.msra.mxu0 0.0
    %1804 = vmatprep.mubr.f32.mxu0 0.0
    %v1805 = vand.u32 %v1377, 4294901760
    %v1806 = vsub.f32 %v1377, %v1805
    %v1807 = vand.u32 %v1806, 4294901760
    %1808 = vmatmul.mubr.f32.gmra.mxu0 %v1807
    %v1809 = vpop.f32.mrf.mxu0
    %v1810 = vadd.f32 %v1721, %v1809
    %v1811 = vpop.f32.mrf.mxu0
    %1812 = vdwg.mxu0
    %1813 = vmatprep.subr.mxu0 0.0
    %v1814 = vand.u32 %v92, 4294901760
    %v1815 = vsub.f32 %v92, %v1814
    %v1816 = vand.u32 %v1815, 4294901760
    %1817 = vmatpush1.msra.mxu0 %v1816
    %1818 = vmatprep.subr.mxu0 0.0
    %v1819 = vand.u32 %v91, 4294901760
    %v1820 = vsub.f32 %v91, %v1819
    %v1821 = vand.u32 %v1820, 4294901760
    %1822 = vmatpush1.msra.mxu0 %v1821
    %1823 = vmatprep.subr.mxu0 0.0
    %v1824 = vand.u32 %v90, 4294901760
    %v1825 = vsub.f32 %v90, %v1824
    %v1826 = vand.u32 %v1825, 4294901760
    %1827 = vmatpush1.msra.mxu0 %v1826
    %1828 = vmatprep.subr.mxu0 0.0
    %v1829 = vand.u32 %v89, 4294901760
    %v1830 = vsub.f32 %v89, %v1829
    %v1831 = vand.u32 %v1830, 4294901760
    %1832 = vmatpush1.msra.mxu0 %v1831
    %1833 = vmatprep.subr.mxu0 0.0
    %v1834 = vand.u32 %v88, 4294901760
    %v1835 = vsub.f32 %v88, %v1834
    %v1836 = vand.u32 %v1835, 4294901760
    %1837 = vmatpush1.msra.mxu0 %v1836
    %1838 = vmatprep.subr.mxu0 0.0
    %v1839 = vand.u32 %v87, 4294901760
    %v1840 = vsub.f32 %v87, %v1839
    %v1841 = vand.u32 %v1840, 4294901760
    %1842 = vmatpush1.msra.mxu0 %v1841
    %1843 = vmatprep.subr.mxu0 0.0
    %v1844 = vand.u32 %v86, 4294901760
    %v1845 = vsub.f32 %v86, %v1844
    %v1846 = vand.u32 %v1845, 4294901760
    %1847 = vmatpush1.msra.mxu0 %v1846
    %1848 = vmatprep.subr.mxu0 0.0
    %v1849 = vand.u32 %v85, 4294901760
    %v1850 = vsub.f32 %v85, %v1849
    %v1851 = vand.u32 %v1850, 4294901760
    %1852 = vmatpush1.msra.mxu0 %v1851
    %1853 = vmatprep.subr.mxu0 0.0
    %v1854 = vand.u32 %v84, 4294901760
    %v1855 = vsub.f32 %v84, %v1854
    %v1856 = vand.u32 %v1855, 4294901760
    %1857 = vmatpush1.msra.mxu0 %v1856
    %1858 = vmatprep.subr.mxu0 0.0
    %v1859 = vand.u32 %v83, 4294901760
    %v1860 = vsub.f32 %v83, %v1859
    %v1861 = vand.u32 %v1860, 4294901760
    %1862 = vmatpush1.msra.mxu0 %v1861
    %1863 = vmatprep.subr.mxu0 0.0
    %v1864 = vand.u32 %v82, 4294901760
    %v1865 = vsub.f32 %v82, %v1864
    %v1866 = vand.u32 %v1865, 4294901760
    %1867 = vmatpush1.msra.mxu0 %v1866
    %1868 = vmatprep.subr.mxu0 0.0
    %v1869 = vand.u32 %v81, 4294901760
    %v1870 = vsub.f32 %v81, %v1869
    %v1871 = vand.u32 %v1870, 4294901760
    %1872 = vmatpush1.msra.mxu0 %v1871
    %1873 = vmatprep.subr.mxu0 0.0
    %v1874 = vand.u32 %v80, 4294901760
    %v1875 = vsub.f32 %v80, %v1874
    %v1876 = vand.u32 %v1875, 4294901760
    %1877 = vmatpush1.msra.mxu0 %v1876
    %1878 = vmatprep.subr.mxu0 0.0
    %v1879 = vand.u32 %v79, 4294901760
    %v1880 = vsub.f32 %v79, %v1879
    %v1881 = vand.u32 %v1880, 4294901760
    %1882 = vmatpush1.msra.mxu0 %v1881
    %1883 = vmatprep.subr.mxu0 0.0
    %v1884 = vand.u32 %v78, 4294901760
    %v1885 = vsub.f32 %v78, %v1884
    %v1886 = vand.u32 %v1885, 4294901760
    %1887 = vmatpush1.msra.mxu0 %v1886
    %1888 = vmatprep.subr.mxu0 0.0
    %v1889 = vand.u32 %v77, 4294901760
    %v1890 = vsub.f32 %v77, %v1889
    %v1891 = vand.u32 %v1890, 4294901760
    %1892 = vmatpush1.msra.mxu0 %v1891
    %1893 = vmatprep.subr.mxu0 0.0
    %1894 = vmatpush2.msra.mxu0 0.0
    %1895 = vmatprep.subr.mxu0 0.0
    %1896 = vmatpush2.msra.mxu0 0.0
    %1897 = vmatprep.subr.mxu0 0.0
    %1898 = vmatpush2.msra.mxu0 0.0
    %1899 = vmatprep.subr.mxu0 0.0
    %1900 = vmatpush2.msra.mxu0 0.0
    %1901 = vmatprep.subr.mxu0 0.0
    %1902 = vmatpush2.msra.mxu0 0.0
    %1903 = vmatprep.subr.mxu0 0.0
    %1904 = vmatpush2.msra.mxu0 0.0
    %1905 = vmatprep.subr.mxu0 0.0
    %1906 = vmatpush2.msra.mxu0 0.0
    %1907 = vmatprep.subr.mxu0 0.0
    %1908 = vmatpush2.msra.mxu0 0.0
    %1909 = vmatprep.subr.mxu0 0.0
    %1910 = vmatpush2.msra.mxu0 0.0
    %1911 = vmatprep.subr.mxu0 0.0
    %1912 = vmatpush2.msra.mxu0 0.0
    %1913 = vmatprep.subr.mxu0 0.0
    %1914 = vmatpush2.msra.mxu0 0.0
    %1915 = vmatprep.subr.mxu0 0.0
    %1916 = vmatpush2.msra.mxu0 0.0
    %1917 = vmatprep.subr.mxu0 0.0
    %1918 = vmatpush2.msra.mxu0 0.0
    %1919 = vmatprep.subr.mxu0 0.0
    %1920 = vmatpush2.msra.mxu0 0.0
    %1921 = vmatprep.subr.mxu0 0.0
    %1922 = vmatpush2.msra.mxu0 0.0
    %1923 = vmatprep.subr.mxu0 0.0
    %1924 = vmatpush2.msra.mxu0 0.0
    %1925 = vmatprep.mubr.f32.mxu0 0.0
    %v1926 = vand.u32 %v1377, 4294901760
    %1927 = vmatmul.mubr.f32.gmra.mxu0 %v1926
    %v1928 = vpop.f32.mrf.mxu0
    %v1929 = vadd.f32 %v1810, %v1928
    %v1930 = vpop.f32.mrf.mxu0
    %1931 = vdwg.mxu0
    %1932 = vmatprep.subr.mxu0 0.0
    %v1933 = vand.u32 %v92, 4294901760
    %1934 = vmatpush1.msra.mxu0 %v1933
    %1935 = vmatprep.subr.mxu0 0.0
    %v1936 = vand.u32 %v91, 4294901760
    %1937 = vmatpush1.msra.mxu0 %v1936
    %1938 = vmatprep.subr.mxu0 0.0
    %v1939 = vand.u32 %v90, 4294901760
    %1940 = vmatpush1.msra.mxu0 %v1939
    %1941 = vmatprep.subr.mxu0 0.0
    %v1942 = vand.u32 %v89, 4294901760
    %1943 = vmatpush1.msra.mxu0 %v1942
    %1944 = vmatprep.subr.mxu0 0.0
    %v1945 = vand.u32 %v88, 4294901760
    %1946 = vmatpush1.msra.mxu0 %v1945
    %1947 = vmatprep.subr.mxu0 0.0
    %v1948 = vand.u32 %v87, 4294901760
    %1949 = vmatpush1.msra.mxu0 %v1948
    %1950 = vmatprep.subr.mxu0 0.0
    %v1951 = vand.u32 %v86, 4294901760
    %1952 = vmatpush1.msra.mxu0 %v1951
    %1953 = vmatprep.subr.mxu0 0.0
    %v1954 = vand.u32 %v85, 4294901760
    %1955 = vmatpush1.msra.mxu0 %v1954
    %1956 = vmatprep.subr.mxu0 0.0
    %v1957 = vand.u32 %v84, 4294901760
    %1958 = vmatpush1.msra.mxu0 %v1957
    %1959 = vmatprep.subr.mxu0 0.0
    %v1960 = vand.u32 %v83, 4294901760
    %1961 = vmatpush1.msra.mxu0 %v1960
    %1962 = vmatprep.subr.mxu0 0.0
    %v1963 = vand.u32 %v82, 4294901760
    %1964 = vmatpush1.msra.mxu0 %v1963
    %1965 = vmatprep.subr.mxu0 0.0
    %v1966 = vand.u32 %v81, 4294901760
    %1967 = vmatpush1.msra.mxu0 %v1966
    %1968 = vmatprep.subr.mxu0 0.0
    %v1969 = vand.u32 %v80, 4294901760
    %1970 = vmatpush1.msra.mxu0 %v1969
    %1971 = vmatprep.subr.mxu0 0.0
    %v1972 = vand.u32 %v79, 4294901760
    %1973 = vmatpush1.msra.mxu0 %v1972
    %1974 = vmatprep.subr.mxu0 0.0
    %v1975 = vand.u32 %v78, 4294901760
    %1976 = vmatpush1.msra.mxu0 %v1975
    %1977 = vmatprep.subr.mxu0 0.0
    %v1978 = vand.u32 %v77, 4294901760
    %1979 = vmatpush1.msra.mxu0 %v1978
    %1980 = vmatprep.subr.mxu0 0.0
    %1981 = vmatpush2.msra.mxu0 0.0
    %1982 = vmatprep.subr.mxu0 0.0
    %1983 = vmatpush2.msra.mxu0 0.0
    %1984 = vmatprep.subr.mxu0 0.0
    %1985 = vmatpush2.msra.mxu0 0.0
    %1986 = vmatprep.subr.mxu0 0.0
    %1987 = vmatpush2.msra.mxu0 0.0
    %1988 = vmatprep.subr.mxu0 0.0
    %1989 = vmatpush2.msra.mxu0 0.0
    %1990 = vmatprep.subr.mxu0 0.0
    %1991 = vmatpush2.msra.mxu0 0.0
    %1992 = vmatprep.subr.mxu0 0.0
    %1993 = vmatpush2.msra.mxu0 0.0
    %1994 = vmatprep.subr.mxu0 0.0
    %1995 = vmatpush2.msra.mxu0 0.0
    %1996 = vmatprep.subr.mxu0 0.0
    %1997 = vmatpush2.msra.mxu0 0.0
    %1998 = vmatprep.subr.mxu0 0.0
    %1999 = vmatpush2.msra.mxu0 0.0
    %2000 = vmatprep.subr.mxu0 0.0
    %2001 = vmatpush2.msra.mxu0 0.0
    %2002 = vmatprep.subr.mxu0 0.0
    %2003 = vmatpush2.msra.mxu0 0.0
    %2004 = vmatprep.subr.mxu0 0.0
    %2005 = vmatpush2.msra.mxu0 0.0
    %2006 = vmatprep.subr.mxu0 0.0
    %2007 = vmatpush2.msra.mxu0 0.0
    %2008 = vmatprep.subr.mxu0 0.0
    %2009 = vmatpush2.msra.mxu0 0.0
    %2010 = vmatprep.subr.mxu0 0.0
    %2011 = vmatpush2.msra.mxu0 0.0
    %2012 = vmatprep.mubr.f32.mxu0 0.0
    %v2013 = vand.u32 %v1377, 4294901760
    %2014 = vmatmul.mubr.f32.gmra.mxu0 %v2013
    %v2015 = vpop.f32.mrf.mxu0
    %v2016 = vadd.f32 %v1929, %v2015
    %v2017 = vpop.f32.mrf.mxu0
    %2018 = vdwg.mxu0
    %v2019 = vmul.f32 %v1374, %v2016
    %v2020 = vmax.f32 %v2019, 1e-16
    %v2021 = vrsqrt.pop %v2020
    %v2022 = vmul.f32 %v732, %v2021
    %s2023 = sadd.s32 0, 0
    %s2024 = sadd.s32 %s2023, 1
    %s2025 = smul.u32 %s2024, 4
    %p2026 = scmp.gt.s32.totalorder %s2025, 4
    %p2027 = scmp.le.s32.totalorder %s2025, 4
    // Predicated region
    $region18: #{tpu_custom_call.1} parent=1 // pred_check
      %p2028 = pneg %p2027
    $region19: #{tpu_custom_call.1} parent=1 // pred_check_branch
      %2030 = sbr.rel (%p2028) target = $region21
    $region20: #{tpu_custom_call.1} parent=1 // pred_region
      %s2031 = sld [smem:[#allocation2]]
      %vm2032 = vcmask 27648
      %v2033 = vsel %vm2032, %v2022, 0.0
      %2034 = vadd.xlane.f32.xlu0 %v2033
      %v2035 = vpop.xlane.xlu0 %2034
      %v2036 = vrot.slane %v2035, 4
      %v2037 = vadd.f32 %v2035, %v2036
      %v2038 = vrot.slane %v2037, 2
      %v2039 = vadd.f32 %v2037, %v2038
      %v2040 = vrot.slane %v2039, 1
      %v2041 = vadd.f32 %v2039, %v2040
      %s2042 = vtos %v2041
      %s2043 = sadd.f32 %s2031, %s2042
      %s2044 = scalar_lea.smem [#allocation2], 0
      %2045 = sst [smem:[%s2044]] %s2043
    $region21: #{tpu_custom_call.1} parent=1 // pred_fallthru
      _
    // Predicated region
    $region22: #{tpu_custom_call.1} parent=1 // pred_check
      %p2046 = pneg %p2026
    $region23: #{tpu_custom_call.1} parent=1 // pred_check_branch
      %2048 = sbr.rel (%p2046) target = $region25
    $region24: #{tpu_custom_call.1} parent=1 // pred_region
      %v2049 = vlaneseq
      %v2050 = vshrl.u32 %v2049, 7
      %s2051 = smul.u32 %s2023, 4
      %v2052 = vstv %s2051
      %v2053 = vadd.s32 %v2052, %v2050
      %vm2054 = vcmp.lt.s32.totalorder %v2053, 4
      %s2055 = sld [smem:[#allocation2]]
      %v2056 = vsel %vm2054, %v2022, 0.0
      %vm2057 = vcmask 27648
      %v2058 = vsel %vm2057, %v2056, 0.0
      %2059 = vadd.xlane.f32.xlu0 %v2058
      %v2060 = vpop.xlane.xlu0 %2059
      %v2061 = vrot.slane %v2060, 4
      %v2062 = vadd.f32 %v2060, %v2061
      %v2063 = vrot.slane %v2062, 2
      %v2064 = vadd.f32 %v2062, %v2063
      %v2065 = vrot.slane %v2064, 1
      %v2066 = vadd.f32 %v2064, %v2065
      %s2067 = vtos %v2066
      %s2068 = sadd.f32 %s2055, %s2067
      %s2069 = scalar_lea.smem [#allocation2], 0
      %2070 = sst [smem:[%s2069]] %s2068
    $region25: #{tpu_custom_call.1} parent=1 // pred_fallthru
      _
    // Predicated region
    $region26: #{tpu_custom_call.1} parent=1 // pred_check
      _
    $region27: #{tpu_custom_call.1} parent=1 // pred_check_branch
      %2072 = sbr.rel (0) target = $region29
    $region28: #{tpu_custom_call.1} parent=1 // pred_region
      %s2074 = ssub.s32 16, 16
      %2075 = vsyncadd [#allocation3], %s2074
      %2078 = dma.smem_to_hbm [#allocation2], 16, %s3, [#allocation3]
    $region29: #{tpu_custom_call.1} parent=1 // pred_fallthru
      _
    // Predicated region
    $region30: #{tpu_custom_call.1} parent=1 // pred_check
      _
    $region31: #{tpu_custom_call.1} parent=1 // pred_check_branch
      %2080 = sbr.rel (0) target = $region33
    $region32: #{tpu_custom_call.1} parent=1 // pred_region
      %2081 = dma.done [#allocation3], 16
    $region33: #{tpu_custom_call.1} parent=1 // pred_fallthru
      _
    %2082 = sfence
    %2083 = vsyncpa [#allocation3], 1

</llo_original>
